<compile_context>
chip_gen: v7x
topology: tpu7x:2x2x1
jax: 0.10.0
libtpu: 0.0.40
codegen_flags: <defaults>
</compile_context>

<pallas_src>
import jax
import jax.numpy as jnp
from jax.experimental import pallas as pl
from jax.experimental.pallas import tpu as pltpu

NEG_SLOPE = 0.01  # F.leaky_relu default


def _leaky_relu(x):
    return jnp.where(x > 0.0, x, NEG_SLOPE * x)


def _elu(x):
    return jnp.where(x > 0.0, x, jnp.exp(jnp.minimum(x, 0.0)) - 1.0)


def _sigmoid_kernel(x):
    # sigmoid(x) = 0.5 * (tanh(x/2) + 1): a single EUP transcendental, no VPU divide.
    return 0.5 * (jnp.tanh(0.5 * x) + 1.0)


def _atom_embedding_kernel(x_ref, ea_ref, src_ref, dst_ref, dstT_ref,
                           wa_ref, ba_ref, wnx_ref, wne_ref, bn_ref,
                           walj_ref, bal_ref, wh_ref, bh_ref, wi_ref, bi_ref,
                           o_ref):
    n_layers = wh_ref.shape[0]          # static
    fp = wh_ref.shape[1]                # static

    # bf16 one-hots (exact) -> upcast once, reused by every layer.
    src = src_ref[...].astype(jnp.float32)       # [E, N]
    dst = dst_ref[...].astype(jnp.float32)       # [E, N]
    dst_t = dstT_ref[...].astype(jnp.float32)    # [N, E]  pre-transposed (dim-0 contractions)
    x = x_ref[...]                               # [N, atom_dim]

    for layer in range(n_layers):                # static, fully unrolled (R is small)
        walj = walj_ref[layer]                   # [fp, 1]
        bal = bal_ref[layer]                     # [1, 1]
        wh = wh_ref[layer]                       # [fp, 4fp+1]  [attend|W_hr|W_hz|W_hn|wali]
        bh = bh_ref[layer]                       # [1, 4fp+1]   [batt | 0 | 0 | bhn | 0]
        wi = wi_ref[layer]                       # [fp, 4fp]    [W_ir | W_iz | W_in | 0]
        bi = bi_ref[layer]                       # [1, 4fp]     [bir+bhr | biz+bhz | bin | 0]

        if layer == 0:
            # Layer-0 linears reassociated to the node side (N rows instead of E); exact
            # because a one-hot row gather commutes with per-row affine + leaky_relu.
            xi_node = _leaky_relu(
                jnp.dot(x, wa_ref[...], preferred_element_type=jnp.float32) + ba_ref[...])
            xj_lin = jnp.dot(x, wnx_ref[...], preferred_element_type=jnp.float32)   # [N, fp]
            ea_lin = (jnp.dot(ea_ref[...], wne_ref[...], preferred_element_type=jnp.float32)
                      + bn_ref[...])                                                 # [E, fp]
            # neighbor_fc(cat([x_j, edge_attr])) needs the per-edge edge_attr term before the
            # leaky_relu, so x_j stays per-edge only here (layer 0).
            x_j = _leaky_relu(jnp.dot(src, xj_lin, preferred_element_type=jnp.float32)
                              + ea_lin)                                              # [E, fp]
            aj = jnp.dot(x_j, walj, preferred_element_type=jnp.float32)              # [E, 1]
        else:
            xi_node = x
            # For layers >= 1, x_j only feeds the align scalar: compute walj on the node side
            # and gather the scalar, instead of gathering the full [E, fp] x_j.
            aj = jnp.dot(src, jnp.dot(x, walj, preferred_element_type=jnp.float32),
                         preferred_element_type=jnp.float32)                         # [E, 1]

        # Packed hidden path (attend | GRU hh gates | align-i) computed on NODE rows, then
        # gathered to edges via the one-hot matmul (MXU).
        hp_node = jnp.dot(xi_node, wh, preferred_element_type=jnp.float32) + bh      # [N, 4fp+1]
        hp = jnp.dot(dst, hp_node, preferred_element_type=jnp.float32)               # [E, 4fp+1]
        x_i = jnp.dot(dst, xi_node, preferred_element_type=jnp.float32)              # [E, fp]

        att = hp[:, 0 * fp:1 * fp]
        h_r = hp[:, 1 * fp:2 * fp]
        h_z = hp[:, 2 * fp:3 * fp]
        h_n = hp[:, 3 * fp:4 * fp]
        ai = hp[:, 4 * fp:4 * fp + 1]

        # Segment softmax grouped by dst; a single global shift suffices (shift-invariant per
        # segment), so no [E,N] mask / per-node max / m_edge gather is needed.
        evu = _leaky_relu(ai + aj + bal)                                              # [E, 1]
        exp_e = jnp.exp(evu - jnp.max(evu, axis=0, keepdims=True))                    # [E, 1]
        s_node = jnp.dot(dst_t, exp_e, preferred_element_type=jnp.float32)            # [N, 1]
        s_edge = jnp.dot(dst, s_node, preferred_element_type=jnp.float32)             # [E, 1]
        avu = exp_e * pl.reciprocal(s_edge + 1e-16, approx=True)                      # [E, 1]

        # context: elu(avu * attend(dropout(x_i)))   (dropout = identity in eval)
        c = _elu(avu * att)                                                           # [E, fp]

        # packed input-path matmul (lane-dense 4fp) + GRU gates
        ip = jnp.dot(c, wi, preferred_element_type=jnp.float32) + bi                  # [E, 4fp]
        r = _sigmoid_kernel(ip[:, 0 * fp:1 * fp] + h_r)
        z = _sigmoid_kernel(ip[:, 1 * fp:2 * fp] + h_z)
        n = jnp.tanh(ip[:, 2 * fp:3 * fp] + r * h_n)
        h_new = (1.0 - z) * n + z * x_i                                               # [E, fp]

        # propagate(): sum-aggregate messages over dst via the pre-transposed one-hot (MXU)
        x = jnp.dot(dst_t, h_new, preferred_element_type=jnp.float32)                 # [N, fp]

    o_ref[...] = x


def pack_layer_params(layer_params):
    """Stack per-layer attention/GRU weights into lane-dense [R, ...] blocks (exact)."""
    fp = layer_params[0]["watt"].shape[0]
    zb = jnp.zeros((1, fp), jnp.float32)
    zb1 = jnp.zeros((1, 1), jnp.float32)
    zw = jnp.zeros((fp, fp), jnp.float32)
    return {
        "walj": jnp.stack([p["walj"].T for p in layer_params]),                # [R, fp, 1]
        "bal": jnp.stack([p["bal"] for p in layer_params]),                    # [R, 1, 1]
        # hidden path + align-i: [attend | W_hr | W_hz | W_hn | wali], bias [batt|0|0|bhn|0]
        "wh": jnp.stack([jnp.concatenate(
                  [p["watt"], p["whr"], p["whz"], p["whn"], p["wali"].T], 1)
                  for p in layer_params]),                                     # [R, fp, 4fp+1]
        "bh": jnp.stack([jnp.concatenate([p["batt"], zb, zb, p["bhn"], zb1], 1)
                         for p in layer_params]),                              # [R, 1, 4fp+1]
        # input path: [W_ir | W_iz | W_in | 0], bias [bir+bhr | biz+bhz | bin | 0]
        "wi": jnp.stack([jnp.concatenate([p["wir"], p["wiz"], p["win"], zw], 1)
                         for p in layer_params]),                              # [R, fp, 4fp]
        "bi": jnp.stack([jnp.concatenate([p["bir"] + p["bhr"], p["biz"] + p["bhz"],
                                          p["bin"], zb], 1)
                         for p in layer_params]),                              # [R, 1, 4fp]
    }


def atom_embedding(x, edge_index, edge_attr, layer_params):
    """AtomEmbedding.forward: R stacked GatConvAtom layers, fused into one pallas_call."""
    n_nodes, atom_dim = x.shape
    n_edges = edge_index.shape[1]
    edge_dim = edge_attr.shape[1]
    fp = layer_params[0]["watt"].shape[0]
    n_layers = len(layer_params)

    src, dst = edge_index[0], edge_index[1]
    # one-hots are exactly representable in bf16 -> halves their HBM DMA / VMEM footprint
    src_oh = jax.nn.one_hot(src, n_nodes, dtype=jnp.bfloat16)    # [E, N]
    dst_oh = jax.nn.one_hot(dst, n_nodes, dtype=jnp.bfloat16)    # [E, N]
    dst_oh_t = dst_oh.T                                          # [N, E] transposed once, host side

    packed = pack_layer_params(layer_params)
    p0 = layer_params[0]

    args = (x, edge_attr, src_oh, dst_oh, dst_oh_t,
            p0["wa"], p0["ba"], p0["wnx"], p0["wne"], p0["bn"],
            packed["walj"], packed["bal"],
            packed["wh"], packed["bh"], packed["wi"], packed["bi"])

    vmem = pl.BlockSpec(memory_space=pltpu.MemorySpace.VMEM)
    in_specs = [vmem] * len(args)

    # rough advisory cost estimate for XLA's scheduler
    flops = 0
    flops += 2 * n_nodes * atom_dim * fp * 2          # layer-0 atom_fc / neighbor_fc (node rows)
    flops += 2 * n_edges * edge_dim * fp              # layer-0 edge_attr linear
    flops += 2 * n_edges * n_nodes * fp               # layer-0 x_j gather
    flops += 2 * n_edges * fp                         # layer-0 align-j
    for layer in range(n_layers):
        if layer > 0:
            flops += 2 * n_nodes * fp + 2 * n_edges * n_nodes       # node-side walj + gather
        flops += 2 * n_nodes * fp * (4 * fp + 1)                    # packed hidden-path (node rows)
        flops += 2 * n_edges * n_nodes * (4 * fp + 1 + fp)          # hp + x_i gathers
        flops += 2 * 2 * n_edges * n_nodes                          # softmax sum + gather
        flops += 2 * n_edges * fp * 4 * fp                          # packed input-path matmul
        flops += 2 * n_edges * n_nodes * fp                         # scatter-add aggregation
    transcendentals = n_layers * n_edges * (4 * fp + 2)
    bytes_accessed = sum(int(a.size) * a.dtype.itemsize for a in args) + n_nodes * fp * 4

    return pl.pallas_call(
        _atom_embedding_kernel,
        out_shape=jax.ShapeDtypeStruct((n_nodes, fp), jnp.float32),
        in_specs=in_specs,
        out_specs=vmem,
        compiler_params=pltpu.CompilerParams(
            # explicit scoped-VMEM limit, sized well inside v7x's 64 MiB physical VMEM
            vmem_limit_bytes=32 * 1024 * 1024,
        ),
        cost_estimate=pl.CostEstimate(flops=flops,
                                      transcendentals=transcendentals,
                                      bytes_accessed=bytes_accessed),
    )(*args)


# ---------------- pure-JAX reference (matches the PyTorch forward in eval mode) ------------
def _sigmoid(x):
    return 1.0 / (1.0 + jnp.exp(-x))


def atom_embedding_reference(x, edge_index, edge_attr, layer_params):
    n_nodes = x.shape[0]
    src, dst = edge_index[0], edge_index[1]
    for step, p in enumerate(layer_params):
        x_i = x[dst]
        x_j = x[src]
        if step == 0:
            x_i = _leaky_relu(x_i @ p["wa"] + p["ba"])
            x_j = _leaky_relu(x_j @ p["wnx"] + edge_attr @ p["wne"] + p["bn"])
        evu = _leaky_relu(x_i @ p["wali"].T + x_j @ p["walj"].T + p["bal"])    # [E, 1]
        m_node = jax.ops.segment_max(evu[:, 0], dst, num_segments=n_nodes)
        e = jnp.exp(evu - m_node[dst][:, None])
        s_node = jax.ops.segment_sum(e[:, 0], dst, num_segments=n_nodes)
        avu = e / (s_node[dst][:, None] + 1e-16)
        c = _elu(avu * (x_i @ p["watt"] + p["batt"]))
        r = _sigmoid(c @ p["wir"] + p["bir"] + x_i @ p["whr"] + p["bhr"])
        z = _sigmoid(c @ p["wiz"] + p["biz"] + x_i @ p["whz"] + p["bhz"])
        n = jnp.tanh(c @ p["win"] + p["bin"] + r * (x_i @ p["whn"] + p["bhn"]))
        h = (1.0 - z) * n + z * x_i
        x = jax.ops.segment_sum(h, dst, num_segments=n_nodes)
    return x


# ---------------- deterministic parameter init (PyTorch-style uniform) ----------------
def _uniform(key, shape, fan_in):
    bound = 1.0 / (fan_in ** 0.5)
    return jax.random.uniform(key, shape, jnp.float32, -bound, bound)


def init_layer(key, atom_dim, edge_dim, fp, step):
    keys = jax.random.split(key, 32)
    p = {}
    k = iter(keys)
    if step == 0:
        p["wa"] = _uniform(next(k), (atom_dim, fp), atom_dim)
        p["ba"] = _uniform(next(k), (1, fp), atom_dim)
        nb_in = atom_dim + edge_dim
        p["wnx"] = _uniform(next(k), (atom_dim, fp), nb_in)
        p["wne"] = _uniform(next(k), (edge_dim, fp), nb_in)
        p["bn"] = _uniform(next(k), (1, fp), nb_in)
    # align: Linear(2*fp, 1), weight split into x_i / x_j halves
    p["wali"] = _uniform(next(k), (1, fp), 2 * fp)
    p["walj"] = _uniform(next(k), (1, fp), 2 * fp)
    p["bal"] = _uniform(next(k), (1, 1), 2 * fp)
    p["watt"] = _uniform(next(k), (fp, fp), fp)
    p["batt"] = _uniform(next(k), (1, fp), fp)
    # GRUCell(fp, fp): weight_ih/weight_hh split into r,z,n gates; both bias sets kept
    for name in ["wir", "wiz", "win", "whr", "whz", "whn"]:
        p[name] = _uniform(next(k), (fp, fp), fp)
    for name in ["bir", "biz", "bin", "bhr", "bhz", "bhn"]:
        p[name] = _uniform(next(k), (1, fp), fp)
    return p


if __name__ == "__main__":
    ATOM_DIM, EDGE_DIM, FP_DIM = 16, 8, 32
    N_NODES, N_EDGES, R = 8, 16, 2

    root = jax.random.PRNGKey(0)
    kx, ke, ks, kd, kp = jax.random.split(root, 5)

    x = jax.random.normal(kx, (N_NODES, ATOM_DIM), jnp.float32)
    edge_attr = jax.random.normal(ke, (N_EDGES, EDGE_DIM), jnp.float32)
    src = jax.random.randint(ks, (N_EDGES,), 0, N_NODES, jnp.int32)
    dst = jax.random.randint(kd, (N_EDGES,), 0, N_NODES, jnp.int32)
    edge_index = jnp.stack([src, dst], axis=0)  # [2, E], row 0 = source, row 1 = target

    layer_keys = jax.random.split(kp, R)
    layer_params = [init_layer(layer_keys[i], ATOM_DIM, EDGE_DIM, FP_DIM, step=i)
                    for i in range(R)]

    out = atom_embedding(x, edge_index, edge_attr, layer_params)
    out = jax.block_until_ready(out)

    assert out.shape == (N_NODES, FP_DIM)
    assert bool(jnp.all(jnp.isfinite(out)))

    ref = atom_embedding_reference(x, edge_index, edge_attr, layer_params)
    max_err = float(jnp.max(jnp.abs(out - ref)))
    assert bool(jnp.allclose(out, ref, rtol=1e-2, atol=1e-3)), max_err

    print("KERNEL_OK")
</pallas_src>

<mosaic_0001>
module attributes {stable_mosaic.version = 11 : i64} {
  func.func @_atom_embedding_kernel(%arg0: memref<8x16xf32, #tpu.memory_space<vmem>>, %arg1: memref<16x8xf32, #tpu.memory_space<vmem>>, %arg2: memref<16x8xbf16, #tpu.memory_space<vmem>>, %arg3: memref<16x8xbf16, #tpu.memory_space<vmem>>, %arg4: memref<8x16xbf16, #tpu.memory_space<vmem>>, %arg5: memref<16x32xf32, #tpu.memory_space<vmem>>, %arg6: memref<1x32xf32, #tpu.memory_space<vmem>>, %arg7: memref<16x32xf32, #tpu.memory_space<vmem>>, %arg8: memref<8x32xf32, #tpu.memory_space<vmem>>, %arg9: memref<1x32xf32, #tpu.memory_space<vmem>>, %arg10: memref<2x32x1xf32, #tpu.memory_space<vmem>>, %arg11: memref<2x1x1xf32, #tpu.memory_space<vmem>>, %arg12: memref<2x32x129xf32, #tpu.memory_space<vmem>>, %arg13: memref<2x1x129xf32, #tpu.memory_space<vmem>>, %arg14: memref<2x32x128xf32, #tpu.memory_space<vmem>>, %arg15: memref<2x1x128xf32, #tpu.memory_space<vmem>>, %arg16: memref<8x32xf32, #tpu.memory_space<vmem>>) attributes {dimension_semantics = [], scalar_prefetch = 0 : i64, scratch_operands = 0 : i64, tpu.core_type = #tpu.core_type<tc>} {
    %c0 = arith.constant 0 : index
    %c0_0 = arith.constant 0 : index
    %0 = vector.load %arg2[%c0, %c0_0] : memref<16x8xbf16, #tpu.memory_space<vmem>>, vector<16x8xbf16>
    %1 = arith.extf %0 : vector<16x8xbf16> to vector<16x8xf32>
    %c0_1 = arith.constant 0 : index
    %c0_2 = arith.constant 0 : index
    %2 = vector.load %arg3[%c0_1, %c0_2] : memref<16x8xbf16, #tpu.memory_space<vmem>>, vector<16x8xbf16>
    %3 = arith.extf %2 : vector<16x8xbf16> to vector<16x8xf32>
    %c0_3 = arith.constant 0 : index
    %c0_4 = arith.constant 0 : index
    %4 = vector.load %arg4[%c0_3, %c0_4] : memref<8x16xbf16, #tpu.memory_space<vmem>>, vector<8x16xbf16>
    %5 = arith.extf %4 : vector<8x16xbf16> to vector<8x16xf32>
    %c0_5 = arith.constant 0 : index
    %c0_6 = arith.constant 0 : index
    %6 = vector.load %arg0[%c0_5, %c0_6] : memref<8x16xf32, #tpu.memory_space<vmem>>, vector<8x16xf32>
    %c0_7 = arith.constant 0 : index
    %c0_8 = arith.constant 0 : index
    %c0_9 = arith.constant 0 : index
    %7 = vector.load %arg10[%c0_7, %c0_8, %c0_9] : memref<2x32x1xf32, #tpu.memory_space<vmem>>, vector<1x32x1xf32>
    %8 = vector.shape_cast %7 : vector<1x32x1xf32> to vector<32x1xf32>
    %c0_10 = arith.constant 0 : index
    %c0_11 = arith.constant 0 : index
    %c0_12 = arith.constant 0 : index
    %9 = vector.load %arg11[%c0_10, %c0_11, %c0_12] : memref<2x1x1xf32, #tpu.memory_space<vmem>>, vector<1x1x1xf32>
    %10 = vector.shape_cast %9 : vector<1x1x1xf32> to vector<1x1xf32>
    %c0_13 = arith.constant 0 : index
    %c0_14 = arith.constant 0 : index
    %c0_15 = arith.constant 0 : index
    %11 = vector.load %arg12[%c0_13, %c0_14, %c0_15] : memref<2x32x129xf32, #tpu.memory_space<vmem>>, vector<1x32x129xf32>
    %12 = vector.shape_cast %11 : vector<1x32x129xf32> to vector<32x129xf32>
    %c0_16 = arith.constant 0 : index
    %c0_17 = arith.constant 0 : index
    %c0_18 = arith.constant 0 : index
    %13 = vector.load %arg13[%c0_16, %c0_17, %c0_18] : memref<2x1x129xf32, #tpu.memory_space<vmem>>, vector<1x1x129xf32>
    %14 = vector.shape_cast %13 : vector<1x1x129xf32> to vector<1x129xf32>
    %c0_19 = arith.constant 0 : index
    %c0_20 = arith.constant 0 : index
    %c0_21 = arith.constant 0 : index
    %15 = vector.load %arg14[%c0_19, %c0_20, %c0_21] : memref<2x32x128xf32, #tpu.memory_space<vmem>>, vector<1x32x128xf32>
    %16 = vector.shape_cast %15 : vector<1x32x128xf32> to vector<32x128xf32>
    %c0_22 = arith.constant 0 : index
    %c0_23 = arith.constant 0 : index
    %c0_24 = arith.constant 0 : index
    %17 = vector.load %arg15[%c0_22, %c0_23, %c0_24] : memref<2x1x128xf32, #tpu.memory_space<vmem>>, vector<1x1x128xf32>
    %18 = vector.shape_cast %17 : vector<1x1x128xf32> to vector<1x128xf32>
    %c0_25 = arith.constant 0 : index
    %c0_26 = arith.constant 0 : index
    %19 = vector.load %arg5[%c0_25, %c0_26] : memref<16x32xf32, #tpu.memory_space<vmem>>, vector<16x32xf32>
    %cst = arith.constant dense<0.000000e+00> : vector<8x32xf32>
    %20 = tpu.matmul %6, %19, %cst {dimension_numbers = #tpu.dot_dimension_numbers<[1], [0], [0], [1], [0, 0, 1, 1], [], []>} : vector<8x16xf32>, vector<16x32xf32>, vector<8x32xf32> -> vector<8x32xf32>
    %c0_27 = arith.constant 0 : index
    %c0_28 = arith.constant 0 : index
    %21 = vector.load %arg6[%c0_27, %c0_28] : memref<1x32xf32, #tpu.memory_space<vmem>>, vector<1x32xf32>
    %22 = vector.broadcast %21 : vector<1x32xf32> to vector<8x32xf32>
    %23 = arith.addf %20, %22 : vector<8x32xf32>
    %cst_29 = arith.constant 0.000000e+00 : f32
    %24 = vector.broadcast %cst_29 : f32 to vector<8x32xf32>
    %25 = arith.cmpf ogt, %23, %24 : vector<8x32xf32>
    %cst_30 = arith.constant 0.00999999977 : f32
    %26 = vector.broadcast %cst_30 : f32 to vector<8x32xf32>
    %27 = arith.mulf %26, %23 : vector<8x32xf32>
    %28 = arith.select %25, %23, %27 : vector<8x32xi1>, vector<8x32xf32>
    %c0_31 = arith.constant 0 : index
    %c0_32 = arith.constant 0 : index
    %29 = vector.load %arg7[%c0_31, %c0_32] : memref<16x32xf32, #tpu.memory_space<vmem>>, vector<16x32xf32>
    %cst_33 = arith.constant dense<0.000000e+00> : vector<8x32xf32>
    %30 = tpu.matmul %6, %29, %cst_33 {dimension_numbers = #tpu.dot_dimension_numbers<[1], [0], [0], [1], [0, 0, 1, 1], [], []>} : vector<8x16xf32>, vector<16x32xf32>, vector<8x32xf32> -> vector<8x32xf32>
    %c0_34 = arith.constant 0 : index
    %c0_35 = arith.constant 0 : index
    %31 = vector.load %arg1[%c0_34, %c0_35] : memref<16x8xf32, #tpu.memory_space<vmem>>, vector<16x8xf32>
    %c0_36 = arith.constant 0 : index
    %c0_37 = arith.constant 0 : index
    %32 = vector.load %arg8[%c0_36, %c0_37] : memref<8x32xf32, #tpu.memory_space<vmem>>, vector<8x32xf32>
    %cst_38 = arith.constant dense<0.000000e+00> : vector<16x32xf32>
    %33 = tpu.matmul %31, %32, %cst_38 {dimension_numbers = #tpu.dot_dimension_numbers<[1], [0], [0], [1], [0, 0, 1, 1], [], []>} : vector<16x8xf32>, vector<8x32xf32>, vector<16x32xf32> -> vector<16x32xf32>
    %c0_39 = arith.constant 0 : index
    %c0_40 = arith.constant 0 : index
    %34 = vector.load %arg9[%c0_39, %c0_40] : memref<1x32xf32, #tpu.memory_space<vmem>>, vector<1x32xf32>
    %35 = vector.broadcast %34 : vector<1x32xf32> to vector<16x32xf32>
    %36 = arith.addf %33, %35 : vector<16x32xf32>
    %cst_41 = arith.constant dense<0.000000e+00> : vector<16x32xf32>
    %37 = tpu.matmul %1, %30, %cst_41 {dimension_numbers = #tpu.dot_dimension_numbers<[1], [0], [0], [1], [0, 0, 1, 1], [], []>} : vector<16x8xf32>, vector<8x32xf32>, vector<16x32xf32> -> vector<16x32xf32>
    %38 = arith.addf %37, %36 : vector<16x32xf32>
    %cst_42 = arith.constant 0.000000e+00 : f32
    %39 = vector.broadcast %cst_42 : f32 to vector<16x32xf32>
    %40 = arith.cmpf ogt, %38, %39 : vector<16x32xf32>
    %cst_43 = arith.constant 0.00999999977 : f32
    %41 = vector.broadcast %cst_43 : f32 to vector<16x32xf32>
    %42 = arith.mulf %41, %38 : vector<16x32xf32>
    %43 = arith.select %40, %38, %42 : vector<16x32xi1>, vector<16x32xf32>
    %cst_44 = arith.constant dense<0.000000e+00> : vector<16x1xf32>
    %44 = tpu.matmul %43, %8, %cst_44 {dimension_numbers = #tpu.dot_dimension_numbers<[1], [0], [0], [1], [0, 0, 1, 1], [], []>} : vector<16x32xf32>, vector<32x1xf32>, vector<16x1xf32> -> vector<16x1xf32>
    %cst_45 = arith.constant dense<0.000000e+00> : vector<8x129xf32>
    %45 = tpu.matmul %28, %12, %cst_45 {dimension_numbers = #tpu.dot_dimension_numbers<[1], [0], [0], [1], [0, 0, 1, 1], [], []>} : vector<8x32xf32>, vector<32x129xf32>, vector<8x129xf32> -> vector<8x129xf32>
    %46 = vector.broadcast %14 : vector<1x129xf32> to vector<8x129xf32>
    %47 = arith.addf %45, %46 : vector<8x129xf32>
    %cst_46 = arith.constant dense<0.000000e+00> : vector<16x129xf32>
    %48 = tpu.matmul %3, %47, %cst_46 {dimension_numbers = #tpu.dot_dimension_numbers<[1], [0], [0], [1], [0, 0, 1, 1], [], []>} : vector<16x8xf32>, vector<8x129xf32>, vector<16x129xf32> -> vector<16x129xf32>
    %cst_47 = arith.constant dense<0.000000e+00> : vector<16x32xf32>
    %49 = tpu.matmul %3, %28, %cst_47 {dimension_numbers = #tpu.dot_dimension_numbers<[1], [0], [0], [1], [0, 0, 1, 1], [], []>} : vector<16x8xf32>, vector<8x32xf32>, vector<16x32xf32> -> vector<16x32xf32>
    %50 = vector.extract_strided_slice %48 {offsets = [0, 0], sizes = [16, 32], strides = [1, 1]} : vector<16x129xf32> to vector<16x32xf32>
    %51 = vector.extract_strided_slice %48 {offsets = [0, 32], sizes = [16, 32], strides = [1, 1]} : vector<16x129xf32> to vector<16x32xf32>
    %52 = vector.extract_strided_slice %48 {offsets = [0, 64], sizes = [16, 32], strides = [1, 1]} : vector<16x129xf32> to vector<16x32xf32>
    %53 = vector.extract_strided_slice %48 {offsets = [0, 96], sizes = [16, 32], strides = [1, 1]} : vector<16x129xf32> to vector<16x32xf32>
    %54 = vector.extract_strided_slice %48 {offsets = [0, 128], sizes = [16, 1], strides = [1, 1]} : vector<16x129xf32> to vector<16x1xf32>
    %55 = arith.addf %54, %44 : vector<16x1xf32>
    %56 = vector.broadcast %10 : vector<1x1xf32> to vector<16x1xf32>
    %57 = arith.addf %55, %56 : vector<16x1xf32>
    %cst_48 = arith.constant 0.000000e+00 : f32
    %58 = vector.broadcast %cst_48 : f32 to vector<16x1xf32>
    %59 = arith.cmpf ogt, %57, %58 : vector<16x1xf32>
    %cst_49 = arith.constant 0.00999999977 : f32
    %60 = vector.broadcast %cst_49 : f32 to vector<16x1xf32>
    %61 = arith.mulf %60, %57 : vector<16x1xf32>
    %62 = arith.select %59, %57, %61 : vector<16x1xi1>, vector<16x1xf32>
    %cst_50 = arith.constant dense<0xFF800000> : vector<1xf32>
    %63 = vector.multi_reduction <maximumf>, %62, %cst_50 [0] : vector<16x1xf32> to vector<1xf32>
    %64 = vector.shape_cast %63 : vector<1xf32> to vector<1x1xf32>
    %65 = vector.broadcast %64 : vector<1x1xf32> to vector<16x1xf32>
    %66 = arith.subf %62, %65 : vector<16x1xf32>
    %67 = math.exp %66 : vector<16x1xf32>
    %cst_51 = arith.constant dense<0.000000e+00> : vector<8x1xf32>
    %68 = tpu.matmul %5, %67, %cst_51 {dimension_numbers = #tpu.dot_dimension_numbers<[1], [0], [0], [1], [0, 0, 1, 1], [], []>} : vector<8x16xf32>, vector<16x1xf32>, vector<8x1xf32> -> vector<8x1xf32>
    %cst_52 = arith.constant dense<0.000000e+00> : vector<16x1xf32>
    %69 = tpu.matmul %3, %68, %cst_52 {dimension_numbers = #tpu.dot_dimension_numbers<[1], [0], [0], [1], [0, 0, 1, 1], [], []>} : vector<16x8xf32>, vector<8x1xf32>, vector<16x1xf32> -> vector<16x1xf32>
    %cst_53 = arith.constant 1.000000e-16 : f32
    %70 = vector.broadcast %cst_53 : f32 to vector<16x1xf32>
    %71 = arith.addf %69, %70 : vector<16x1xf32>
    %72 = tpu.reciprocal %71 {approx = true} : vector<16x1xf32> -> vector<16x1xf32>
    %73 = arith.mulf %67, %72 : vector<16x1xf32>
    %74 = vector.broadcast %73 : vector<16x1xf32> to vector<16x32xf32>
    %75 = arith.mulf %74, %50 : vector<16x32xf32>
    %cst_54 = arith.constant 0.000000e+00 : f32
    %76 = vector.broadcast %cst_54 : f32 to vector<16x32xf32>
    %77 = arith.cmpf ogt, %75, %76 : vector<16x32xf32>
    %cst_55 = arith.constant 0.000000e+00 : f32
    %78 = vector.broadcast %cst_55 : f32 to vector<16x32xf32>
    %79 = arith.minimumf %75, %78 : vector<16x32xf32>
    %80 = math.exp %79 : vector<16x32xf32>
    %cst_56 = arith.constant 1.000000e+00 : f32
    %81 = vector.broadcast %cst_56 : f32 to vector<16x32xf32>
    %82 = arith.subf %80, %81 : vector<16x32xf32>
    %83 = arith.select %77, %75, %82 : vector<16x32xi1>, vector<16x32xf32>
    %cst_57 = arith.constant dense<0.000000e+00> : vector<16x128xf32>
    %84 = tpu.matmul %83, %16, %cst_57 {dimension_numbers = #tpu.dot_dimension_numbers<[1], [0], [0], [1], [0, 0, 1, 1], [], []>} : vector<16x32xf32>, vector<32x128xf32>, vector<16x128xf32> -> vector<16x128xf32>
    %85 = vector.broadcast %18 : vector<1x128xf32> to vector<16x128xf32>
    %86 = arith.addf %84, %85 : vector<16x128xf32>
    %87 = vector.extract_strided_slice %86 {offsets = [0, 0], sizes = [16, 32], strides = [1, 1]} : vector<16x128xf32> to vector<16x32xf32>
    %88 = arith.addf %87, %51 : vector<16x32xf32>
    %cst_58 = arith.constant 5.000000e-01 : f32
    %89 = vector.broadcast %cst_58 : f32 to vector<16x32xf32>
    %90 = arith.mulf %89, %88 : vector<16x32xf32>
    %91 = math.tanh %90 : vector<16x32xf32>
    %cst_59 = arith.constant 1.000000e+00 : f32
    %92 = vector.broadcast %cst_59 : f32 to vector<16x32xf32>
    %93 = arith.addf %91, %92 : vector<16x32xf32>
    %cst_60 = arith.constant 5.000000e-01 : f32
    %94 = vector.broadcast %cst_60 : f32 to vector<16x32xf32>
    %95 = arith.mulf %94, %93 : vector<16x32xf32>
    %96 = vector.extract_strided_slice %86 {offsets = [0, 32], sizes = [16, 32], strides = [1, 1]} : vector<16x128xf32> to vector<16x32xf32>
    %97 = arith.addf %96, %52 : vector<16x32xf32>
    %cst_61 = arith.constant 5.000000e-01 : f32
    %98 = vector.broadcast %cst_61 : f32 to vector<16x32xf32>
    %99 = arith.mulf %98, %97 : vector<16x32xf32>
    %100 = math.tanh %99 : vector<16x32xf32>
    %cst_62 = arith.constant 1.000000e+00 : f32
    %101 = vector.broadcast %cst_62 : f32 to vector<16x32xf32>
    %102 = arith.addf %100, %101 : vector<16x32xf32>
    %cst_63 = arith.constant 5.000000e-01 : f32
    %103 = vector.broadcast %cst_63 : f32 to vector<16x32xf32>
    %104 = arith.mulf %103, %102 : vector<16x32xf32>
    %105 = vector.extract_strided_slice %86 {offsets = [0, 64], sizes = [16, 32], strides = [1, 1]} : vector<16x128xf32> to vector<16x32xf32>
    %106 = arith.mulf %95, %53 : vector<16x32xf32>
    %107 = arith.addf %105, %106 : vector<16x32xf32>
    %108 = math.tanh %107 : vector<16x32xf32>
    %cst_64 = arith.constant 1.000000e+00 : f32
    %109 = vector.broadcast %cst_64 : f32 to vector<16x32xf32>
    %110 = arith.subf %109, %104 : vector<16x32xf32>
    %111 = arith.mulf %110, %108 : vector<16x32xf32>
    %112 = arith.mulf %104, %49 : vector<16x32xf32>
    %113 = arith.addf %111, %112 : vector<16x32xf32>
    %cst_65 = arith.constant dense<0.000000e+00> : vector<8x32xf32>
    %114 = tpu.matmul %5, %113, %cst_65 {dimension_numbers = #tpu.dot_dimension_numbers<[1], [0], [0], [1], [0, 0, 1, 1], [], []>} : vector<8x16xf32>, vector<16x32xf32>, vector<8x32xf32> -> vector<8x32xf32>
    %c1 = arith.constant 1 : index
    %c0_66 = arith.constant 0 : index
    %c0_67 = arith.constant 0 : index
    %115 = vector.load %arg10[%c1, %c0_66, %c0_67] : memref<2x32x1xf32, #tpu.memory_space<vmem>>, vector<1x32x1xf32>
    %116 = vector.shape_cast %115 : vector<1x32x1xf32> to vector<32x1xf32>
    %c1_68 = arith.constant 1 : index
    %c0_69 = arith.constant 0 : index
    %c0_70 = arith.constant 0 : index
    %117 = vector.load %arg11[%c1_68, %c0_69, %c0_70] : memref<2x1x1xf32, #tpu.memory_space<vmem>>, vector<1x1x1xf32>
    %118 = vector.shape_cast %117 : vector<1x1x1xf32> to vector<1x1xf32>
    %c1_71 = arith.constant 1 : index
    %c0_72 = arith.constant 0 : index
    %c0_73 = arith.constant 0 : index
    %119 = vector.load %arg12[%c1_71, %c0_72, %c0_73] : memref<2x32x129xf32, #tpu.memory_space<vmem>>, vector<1x32x129xf32>
    %120 = vector.shape_cast %119 : vector<1x32x129xf32> to vector<32x129xf32>
    %c1_74 = arith.constant 1 : index
    %c0_75 = arith.constant 0 : index
    %c0_76 = arith.constant 0 : index
    %121 = vector.load %arg13[%c1_74, %c0_75, %c0_76] : memref<2x1x129xf32, #tpu.memory_space<vmem>>, vector<1x1x129xf32>
    %122 = vector.shape_cast %121 : vector<1x1x129xf32> to vector<1x129xf32>
    %c1_77 = arith.constant 1 : index
    %c0_78 = arith.constant 0 : index
    %c0_79 = arith.constant 0 : index
    %123 = vector.load %arg14[%c1_77, %c0_78, %c0_79] : memref<2x32x128xf32, #tpu.memory_space<vmem>>, vector<1x32x128xf32>
    %124 = vector.shape_cast %123 : vector<1x32x128xf32> to vector<32x128xf32>
    %c1_80 = arith.constant 1 : index
    %c0_81 = arith.constant 0 : index
    %c0_82 = arith.constant 0 : index
    %125 = vector.load %arg15[%c1_80, %c0_81, %c0_82] : memref<2x1x128xf32, #tpu.memory_space<vmem>>, vector<1x1x128xf32>
    %126 = vector.shape_cast %125 : vector<1x1x128xf32> to vector<1x128xf32>
    %cst_83 = arith.constant dense<0.000000e+00> : vector<8x1xf32>
    %127 = tpu.matmul %114, %116, %cst_83 {dimension_numbers = #tpu.dot_dimension_numbers<[1], [0], [0], [1], [0, 0, 1, 1], [], []>} : vector<8x32xf32>, vector<32x1xf32>, vector<8x1xf32> -> vector<8x1xf32>
    %cst_84 = arith.constant dense<0.000000e+00> : vector<16x1xf32>
    %128 = tpu.matmul %1, %127, %cst_84 {dimension_numbers = #tpu.dot_dimension_numbers<[1], [0], [0], [1], [0, 0, 1, 1], [], []>} : vector<16x8xf32>, vector<8x1xf32>, vector<16x1xf32> -> vector<16x1xf32>
    %cst_85 = arith.constant dense<0.000000e+00> : vector<8x129xf32>
    %129 = tpu.matmul %114, %120, %cst_85 {dimension_numbers = #tpu.dot_dimension_numbers<[1], [0], [0], [1], [0, 0, 1, 1], [], []>} : vector<8x32xf32>, vector<32x129xf32>, vector<8x129xf32> -> vector<8x129xf32>
    %130 = vector.broadcast %122 : vector<1x129xf32> to vector<8x129xf32>
    %131 = arith.addf %129, %130 : vector<8x129xf32>
    %cst_86 = arith.constant dense<0.000000e+00> : vector<16x129xf32>
    %132 = tpu.matmul %3, %131, %cst_86 {dimension_numbers = #tpu.dot_dimension_numbers<[1], [0], [0], [1], [0, 0, 1, 1], [], []>} : vector<16x8xf32>, vector<8x129xf32>, vector<16x129xf32> -> vector<16x129xf32>
    %cst_87 = arith.constant dense<0.000000e+00> : vector<16x32xf32>
    %133 = tpu.matmul %3, %114, %cst_87 {dimension_numbers = #tpu.dot_dimension_numbers<[1], [0], [0], [1], [0, 0, 1, 1], [], []>} : vector<16x8xf32>, vector<8x32xf32>, vector<16x32xf32> -> vector<16x32xf32>
    %134 = vector.extract_strided_slice %132 {offsets = [0, 0], sizes = [16, 32], strides = [1, 1]} : vector<16x129xf32> to vector<16x32xf32>
    %135 = vector.extract_strided_slice %132 {offsets = [0, 32], sizes = [16, 32], strides = [1, 1]} : vector<16x129xf32> to vector<16x32xf32>
    %136 = vector.extract_strided_slice %132 {offsets = [0, 64], sizes = [16, 32], strides = [1, 1]} : vector<16x129xf32> to vector<16x32xf32>
    %137 = vector.extract_strided_slice %132 {offsets = [0, 96], sizes = [16, 32], strides = [1, 1]} : vector<16x129xf32> to vector<16x32xf32>
    %138 = vector.extract_strided_slice %132 {offsets = [0, 128], sizes = [16, 1], strides = [1, 1]} : vector<16x129xf32> to vector<16x1xf32>
    %139 = arith.addf %138, %128 : vector<16x1xf32>
    %140 = vector.broadcast %118 : vector<1x1xf32> to vector<16x1xf32>
    %141 = arith.addf %139, %140 : vector<16x1xf32>
    %cst_88 = arith.constant 0.000000e+00 : f32
    %142 = vector.broadcast %cst_88 : f32 to vector<16x1xf32>
    %143 = arith.cmpf ogt, %141, %142 : vector<16x1xf32>
    %cst_89 = arith.constant 0.00999999977 : f32
    %144 = vector.broadcast %cst_89 : f32 to vector<16x1xf32>
    %145 = arith.mulf %144, %141 : vector<16x1xf32>
    %146 = arith.select %143, %141, %145 : vector<16x1xi1>, vector<16x1xf32>
    %cst_90 = arith.constant dense<0xFF800000> : vector<1xf32>
    %147 = vector.multi_reduction <maximumf>, %146, %cst_90 [0] : vector<16x1xf32> to vector<1xf32>
    %148 = vector.shape_cast %147 : vector<1xf32> to vector<1x1xf32>
    %149 = vector.broadcast %148 : vector<1x1xf32> to vector<16x1xf32>
    %150 = arith.subf %146, %149 : vector<16x1xf32>
    %151 = math.exp %150 : vector<16x1xf32>
    %cst_91 = arith.constant dense<0.000000e+00> : vector<8x1xf32>
    %152 = tpu.matmul %5, %151, %cst_91 {dimension_numbers = #tpu.dot_dimension_numbers<[1], [0], [0], [1], [0, 0, 1, 1], [], []>} : vector<8x16xf32>, vector<16x1xf32>, vector<8x1xf32> -> vector<8x1xf32>
    %cst_92 = arith.constant dense<0.000000e+00> : vector<16x1xf32>
    %153 = tpu.matmul %3, %152, %cst_92 {dimension_numbers = #tpu.dot_dimension_numbers<[1], [0], [0], [1], [0, 0, 1, 1], [], []>} : vector<16x8xf32>, vector<8x1xf32>, vector<16x1xf32> -> vector<16x1xf32>
    %cst_93 = arith.constant 1.000000e-16 : f32
    %154 = vector.broadcast %cst_93 : f32 to vector<16x1xf32>
    %155 = arith.addf %153, %154 : vector<16x1xf32>
    %156 = tpu.reciprocal %155 {approx = true} : vector<16x1xf32> -> vector<16x1xf32>
    %157 = arith.mulf %151, %156 : vector<16x1xf32>
    %158 = vector.broadcast %157 : vector<16x1xf32> to vector<16x32xf32>
    %159 = arith.mulf %158, %134 : vector<16x32xf32>
    %cst_94 = arith.constant 0.000000e+00 : f32
    %160 = vector.broadcast %cst_94 : f32 to vector<16x32xf32>
    %161 = arith.cmpf ogt, %159, %160 : vector<16x32xf32>
    %cst_95 = arith.constant 0.000000e+00 : f32
    %162 = vector.broadcast %cst_95 : f32 to vector<16x32xf32>
    %163 = arith.minimumf %159, %162 : vector<16x32xf32>
    %164 = math.exp %163 : vector<16x32xf32>
    %cst_96 = arith.constant 1.000000e+00 : f32
    %165 = vector.broadcast %cst_96 : f32 to vector<16x32xf32>
    %166 = arith.subf %164, %165 : vector<16x32xf32>
    %167 = arith.select %161, %159, %166 : vector<16x32xi1>, vector<16x32xf32>
    %cst_97 = arith.constant dense<0.000000e+00> : vector<16x128xf32>
    %168 = tpu.matmul %167, %124, %cst_97 {dimension_numbers = #tpu.dot_dimension_numbers<[1], [0], [0], [1], [0, 0, 1, 1], [], []>} : vector<16x32xf32>, vector<32x128xf32>, vector<16x128xf32> -> vector<16x128xf32>
    %169 = vector.broadcast %126 : vector<1x128xf32> to vector<16x128xf32>
    %170 = arith.addf %168, %169 : vector<16x128xf32>
    %171 = vector.extract_strided_slice %170 {offsets = [0, 0], sizes = [16, 32], strides = [1, 1]} : vector<16x128xf32> to vector<16x32xf32>
    %172 = arith.addf %171, %135 : vector<16x32xf32>
    %cst_98 = arith.constant 5.000000e-01 : f32
    %173 = vector.broadcast %cst_98 : f32 to vector<16x32xf32>
    %174 = arith.mulf %173, %172 : vector<16x32xf32>
    %175 = math.tanh %174 : vector<16x32xf32>
    %cst_99 = arith.constant 1.000000e+00 : f32
    %176 = vector.broadcast %cst_99 : f32 to vector<16x32xf32>
    %177 = arith.addf %175, %176 : vector<16x32xf32>
    %cst_100 = arith.constant 5.000000e-01 : f32
    %178 = vector.broadcast %cst_100 : f32 to vector<16x32xf32>
    %179 = arith.mulf %178, %177 : vector<16x32xf32>
    %180 = vector.extract_strided_slice %170 {offsets = [0, 32], sizes = [16, 32], strides = [1, 1]} : vector<16x128xf32> to vector<16x32xf32>
    %181 = arith.addf %180, %136 : vector<16x32xf32>
    %cst_101 = arith.constant 5.000000e-01 : f32
    %182 = vector.broadcast %cst_101 : f32 to vector<16x32xf32>
    %183 = arith.mulf %182, %181 : vector<16x32xf32>
    %184 = math.tanh %183 : vector<16x32xf32>
    %cst_102 = arith.constant 1.000000e+00 : f32
    %185 = vector.broadcast %cst_102 : f32 to vector<16x32xf32>
    %186 = arith.addf %184, %185 : vector<16x32xf32>
    %cst_103 = arith.constant 5.000000e-01 : f32
    %187 = vector.broadcast %cst_103 : f32 to vector<16x32xf32>
    %188 = arith.mulf %187, %186 : vector<16x32xf32>
    %189 = vector.extract_strided_slice %170 {offsets = [0, 64], sizes = [16, 32], strides = [1, 1]} : vector<16x128xf32> to vector<16x32xf32>
    %190 = arith.mulf %179, %137 : vector<16x32xf32>
    %191 = arith.addf %189, %190 : vector<16x32xf32>
    %192 = math.tanh %191 : vector<16x32xf32>
    %cst_104 = arith.constant 1.000000e+00 : f32
    %193 = vector.broadcast %cst_104 : f32 to vector<16x32xf32>
    %194 = arith.subf %193, %188 : vector<16x32xf32>
    %195 = arith.mulf %194, %192 : vector<16x32xf32>
    %196 = arith.mulf %188, %133 : vector<16x32xf32>
    %197 = arith.addf %195, %196 : vector<16x32xf32>
    %cst_105 = arith.constant dense<0.000000e+00> : vector<8x32xf32>
    %198 = tpu.matmul %5, %197, %cst_105 {dimension_numbers = #tpu.dot_dimension_numbers<[1], [0], [0], [1], [0, 0, 1, 1], [], []>} : vector<8x16xf32>, vector<16x32xf32>, vector<8x32xf32> -> vector<8x32xf32>
    %c0_106 = arith.constant 0 : index
    %c0_107 = arith.constant 0 : index
    %199 = vector.load %arg16[%c0_106, %c0_107] : memref<8x32xf32, #tpu.memory_space<vmem>>, vector<8x32xf32>
    tpu.vector_store %arg16[%c0_106, %c0_107], %198 {strides = array<i32>} : memref<8x32xf32, #tpu.memory_space<vmem>>, vector<8x32xf32>,
    return
  }
}

</mosaic_0001>

<llo_original>
// kernel: tpu_custom_call.1
$region0: #{tpu_custom_call.1}
  #allocation0 [shape = 'u32[]', space=smem, size = 0x4, offset = 0x4, fixed_abs, tag = 'smem constant byte address 0x4 - core index']
  #allocation1 [shape = 'u32[144,128]{1,0:T(1,128)}', space=vmem, size = 0x12000, scoped, tag = 'internal scratch']
  %s0 = inlined_call_operand.hbm [shape: f32[8,16], index: 0, kind: input, shape index: {}]
  %s1 = inlined_call_operand.vmem [shape: f32[16,8], index: 1, kind: input, shape index: {}]
  %s2 = inlined_call_operand.vmem [shape: bf16[16,8], index: 2, kind: input, shape index: {}]
  %s3 = inlined_call_operand.vmem [shape: bf16[16,8], index: 3, kind: input, shape index: {}]
  %s4 = inlined_call_operand.hbm [shape: bf16[8,16], index: 4, kind: input, shape index: {}]
  %s5 = inlined_call_operand.vmem [shape: f32[16,32], index: 5, kind: input, shape index: {}]
  %s6 = inlined_call_operand.hbm [shape: f32[1,32], index: 6, kind: input, shape index: {}]
  %s7 = inlined_call_operand.vmem [shape: f32[16,32], index: 7, kind: input, shape index: {}]
  %s8 = inlined_call_operand.hbm [shape: f32[8,32], index: 8, kind: input, shape index: {}]
  %s9 = inlined_call_operand.hbm [shape: f32[1,32], index: 9, kind: input, shape index: {}]
  %s10 = inlined_call_operand.vmem [shape: f32[2,32,1], index: 10, kind: input, shape index: {}]
  %s11 = inlined_call_operand.vmem [shape: f32[2,1,1], index: 11, kind: input, shape index: {}]
  %s12 = inlined_call_operand.vmem [shape: f32[2,32,129], index: 12, kind: input, shape index: {}]
  %s13 = inlined_call_operand.vmem [shape: f32[2,1,129], index: 13, kind: input, shape index: {}]
  %s14 = inlined_call_operand.hbm [shape: f32[2,32,128], index: 14, kind: input, shape index: {}]
  %s15 = inlined_call_operand.vmem [shape: f32[2,1,128], index: 15, kind: input, shape index: {}]
  %s16 = inlined_call_operand.hbm [shape: f32[8,32], index: 16, kind: output, shape index: {}]
  %s17 = sld [smem:[#allocation0]]
  $region98: #{tpu_custom_call.1} parent=0
    _
  %s19 = ssub.s32 1, %s17
  %s20 = scalar_select 0, %s19, %s17
  $region1: #{tpu_custom_call.1} parent=0
    #allocation2 [shape = 'u8[4096]{0}', space=vmem, size = 0x1000, scoped, tag = 'input window, operand 0, single buffered']
    #allocation3 [shape = 's32[1]{0}', space=sflag, size = 0x4, scoped, tag = 'scoped memory for tpu_custom_call.1']
    #allocation4 [shape = 's32[1]{0}', space=sflag, size = 0x4, scoped, tag = 'scoped memory for tpu_custom_call.1']
    #allocation5 [shape = 'u8[2048]{0}', space=vmem, size = 0x800, scoped, tag = 'input window, operand 4, single buffered']
    #allocation6 [shape = 's32[1]{0}', space=sflag, size = 0x4, scoped, tag = 'scoped memory for tpu_custom_call.1']
    #allocation7 [shape = 'u8[512]{0}', space=vmem, size = 0x400, scoped, tag = 'input window, operand 6, single buffered']
    #allocation8 [shape = 'u8[4096]{0}', space=vmem, size = 0x1000, scoped, tag = 'input window, operand 8, single buffered']
    #allocation9 [shape = 's32[1]{0}', space=sflag, size = 0x4, scoped, tag = 'scoped memory for tpu_custom_call.1']
    #allocation10 [shape = 'u8[512]{0}', space=vmem, size = 0x400, scoped, tag = 'input window, operand 9, single buffered']
    #allocation11 [shape = 'u8[32768]{0}', space=vmem, size = 0x8000, scoped, tag = 'input window, operand 14, single buffered']
    #allocation12 [shape = 's32[1]{0}', space=sflag, size = 0x4, scoped, tag = 'scoped memory for tpu_custom_call.1']
    #allocation13 [shape = 'u8[4096]{0}', space=vmem, size = 0x1000, scoped, tag = 'output window, operand 0, single buffered']
    %21 = vsyncpa [#allocation3], 0
    %22 = vsyncpa [#allocation6], 0
    %23 = vsyncpa [#allocation9], 0
    %24 = vsyncpa [#allocation12], 0
    %25 = vsyncpa [#allocation4], 0
    // Predicated region
    $region2: #{tpu_custom_call.1} parent=1 // pred_check
      _
    $region3: #{tpu_custom_call.1} parent=1 // pred_check_branch
      %27 = sbr.rel (0) target = $region5
    $region4: #{tpu_custom_call.1} parent=1 // pred_region
      %s29 = ssub.s32 128, 128
      %30 = vsyncadd [#allocation3], %s29
      %s32 = sshll.u32 [#allocation2], 4
      %s33 = int_to_ptr.vmem [resolvable:$true] %s32
      %35 = dma.hbm_to_vmem [thread:$0]  %s0, 128, %s33, [#allocation3]
    $region5: #{tpu_custom_call.1} parent=1 // pred_fallthru
      _
    // Predicated region
    $region6: #{tpu_custom_call.1} parent=1 // pred_check
      _
    $region7: #{tpu_custom_call.1} parent=1 // pred_check_branch
      %37 = sbr.rel (0) target = $region9
    $region8: #{tpu_custom_call.1} parent=1 // pred_region
      _
    $region9: #{tpu_custom_call.1} parent=1 // pred_fallthru
      _
    // Predicated region
    $region10: #{tpu_custom_call.1} parent=1 // pred_check
      _
    $region11: #{tpu_custom_call.1} parent=1 // pred_check_branch
      %39 = sbr.rel (0) target = $region13
    $region12: #{tpu_custom_call.1} parent=1 // pred_region
      _
    $region13: #{tpu_custom_call.1} parent=1 // pred_fallthru
      _
    // Predicated region
    $region14: #{tpu_custom_call.1} parent=1 // pred_check
      _
    $region15: #{tpu_custom_call.1} parent=1 // pred_check_branch
      %41 = sbr.rel (0) target = $region17
    $region16: #{tpu_custom_call.1} parent=1 // pred_region
      _
    $region17: #{tpu_custom_call.1} parent=1 // pred_fallthru
      _
    // Predicated region
    $region18: #{tpu_custom_call.1} parent=1 // pred_check
      _
    $region19: #{tpu_custom_call.1} parent=1 // pred_check_branch
      %43 = sbr.rel (0) target = $region21
    $region20: #{tpu_custom_call.1} parent=1 // pred_region
      %s45 = ssub.s32 64, 64
      %46 = vsyncadd [#allocation6], %s45
      %s48 = sshll.u32 [#allocation5], 4
      %s49 = int_to_ptr.vmem [resolvable:$true] %s48
      %51 = dma.hbm_to_vmem [thread:$0]  %s4, 64, %s49, [#allocation6]
    $region21: #{tpu_custom_call.1} parent=1 // pred_fallthru
      _
    // Predicated region
    $region22: #{tpu_custom_call.1} parent=1 // pred_check
      _
    $region23: #{tpu_custom_call.1} parent=1 // pred_check_branch
      %53 = sbr.rel (0) target = $region25
    $region24: #{tpu_custom_call.1} parent=1 // pred_region
      _
    $region25: #{tpu_custom_call.1} parent=1 // pred_fallthru
      _
    // Predicated region
    $region26: #{tpu_custom_call.1} parent=1 // pred_check
      _
    $region27: #{tpu_custom_call.1} parent=1 // pred_check_branch
      %55 = sbr.rel (0) target = $region29
    $region28: #{tpu_custom_call.1} parent=1 // pred_region
      %s57 = ssub.s32 16, 16
      %58 = vsyncadd [#allocation6], %s57
      %s60 = sshll.u32 [#allocation7], 4
      %s61 = int_to_ptr.vmem [resolvable:$true] %s60
      %63 = dma.hbm_to_vmem [thread:$0]  %s6, 16, %s61, [#allocation6]
    $region29: #{tpu_custom_call.1} parent=1 // pred_fallthru
      _
    // Predicated region
    $region30: #{tpu_custom_call.1} parent=1 // pred_check
      _
    $region31: #{tpu_custom_call.1} parent=1 // pred_check_branch
      %65 = sbr.rel (0) target = $region33
    $region32: #{tpu_custom_call.1} parent=1 // pred_region
      _
    $region33: #{tpu_custom_call.1} parent=1 // pred_fallthru
      _
    // Predicated region
    $region34: #{tpu_custom_call.1} parent=1 // pred_check
      _
    $region35: #{tpu_custom_call.1} parent=1 // pred_check_branch
      %67 = sbr.rel (0) target = $region37
    $region36: #{tpu_custom_call.1} parent=1 // pred_region
      %s69 = ssub.s32 128, 128
      %70 = vsyncadd [#allocation9], %s69
      %s72 = sshll.u32 [#allocation8], 4
      %s73 = int_to_ptr.vmem [resolvable:$true] %s72
      %75 = dma.hbm_to_vmem [thread:$0]  %s8, 128, %s73, [#allocation9]
    $region37: #{tpu_custom_call.1} parent=1 // pred_fallthru
      _
    // Predicated region
    $region38: #{tpu_custom_call.1} parent=1 // pred_check
      _
    $region39: #{tpu_custom_call.1} parent=1 // pred_check_branch
      %77 = sbr.rel (0) target = $region41
    $region40: #{tpu_custom_call.1} parent=1 // pred_region
      %s79 = ssub.s32 16, 16
      %80 = vsyncadd [#allocation9], %s79
      %s82 = sshll.u32 [#allocation10], 4
      %s83 = int_to_ptr.vmem [resolvable:$true] %s82
      %85 = dma.hbm_to_vmem [thread:$0]  %s9, 16, %s83, [#allocation9]
    $region41: #{tpu_custom_call.1} parent=1 // pred_fallthru
      _
    // Predicated region
    $region42: #{tpu_custom_call.1} parent=1 // pred_check
      _
    $region43: #{tpu_custom_call.1} parent=1 // pred_check_branch
      %87 = sbr.rel (0) target = $region45
    $region44: #{tpu_custom_call.1} parent=1 // pred_region
      _
    $region45: #{tpu_custom_call.1} parent=1 // pred_fallthru
      _
    // Predicated region
    $region46: #{tpu_custom_call.1} parent=1 // pred_check
      _
    $region47: #{tpu_custom_call.1} parent=1 // pred_check_branch
      %89 = sbr.rel (0) target = $region49
    $region48: #{tpu_custom_call.1} parent=1 // pred_region
      _
    $region49: #{tpu_custom_call.1} parent=1 // pred_fallthru
      _
    // Predicated region
    $region50: #{tpu_custom_call.1} parent=1 // pred_check
      _
    $region51: #{tpu_custom_call.1} parent=1 // pred_check_branch
      %91 = sbr.rel (0) target = $region53
    $region52: #{tpu_custom_call.1} parent=1 // pred_region
      _
    $region53: #{tpu_custom_call.1} parent=1 // pred_fallthru
      _
    // Predicated region
    $region54: #{tpu_custom_call.1} parent=1 // pred_check
      _
    $region55: #{tpu_custom_call.1} parent=1 // pred_check_branch
      %93 = sbr.rel (0) target = $region57
    $region56: #{tpu_custom_call.1} parent=1 // pred_region
      _
    $region57: #{tpu_custom_call.1} parent=1 // pred_fallthru
      _
    // Predicated region
    $region58: #{tpu_custom_call.1} parent=1 // pred_check
      _
    $region59: #{tpu_custom_call.1} parent=1 // pred_check_branch
      %95 = sbr.rel (0) target = $region61
    $region60: #{tpu_custom_call.1} parent=1 // pred_region
      %s97 = ssub.s32 1024, 1024
      %98 = vsyncadd [#allocation12], %s97
      %s99 = sshll.u32 [#allocation11], 4
      %s100 = int_to_ptr.vmem [resolvable:$true] %s99
      %105 = dma.hbm_to_vmem [thread:$0]  %s14, 1024, %s100, [#allocation12], 128, 128, 8
    $region61: #{tpu_custom_call.1} parent=1 // pred_fallthru
      _
    // Predicated region
    $region62: #{tpu_custom_call.1} parent=1 // pred_check
      _
    $region63: #{tpu_custom_call.1} parent=1 // pred_check_branch
      %107 = sbr.rel (0) target = $region65
    $region64: #{tpu_custom_call.1} parent=1 // pred_region
      _
    $region65: #{tpu_custom_call.1} parent=1 // pred_fallthru
      _
    // Predicated region
    $region66: #{tpu_custom_call.1} parent=1 // pred_check
      _
    $region67: #{tpu_custom_call.1} parent=1 // pred_check_branch
      %109 = sbr.rel (0) target = $region69
    $region68: #{tpu_custom_call.1} parent=1 // pred_region
      %110 = dma.done [#allocation3], 128
    $region69: #{tpu_custom_call.1} parent=1 // pred_fallthru
      _
    // Predicated region
    $region70: #{tpu_custom_call.1} parent=1 // pred_check
      _
    $region71: #{tpu_custom_call.1} parent=1 // pred_check_branch
      %112 = sbr.rel (0) target = $region73
    $region72: #{tpu_custom_call.1} parent=1 // pred_region
      %113 = dma.done [#allocation6], 64
    $region73: #{tpu_custom_call.1} parent=1 // pred_fallthru
      _
    // Predicated region
    $region74: #{tpu_custom_call.1} parent=1 // pred_check
      _
    $region75: #{tpu_custom_call.1} parent=1 // pred_check_branch
      %115 = sbr.rel (0) target = $region77
    $region76: #{tpu_custom_call.1} parent=1 // pred_region
      %116 = dma.done [#allocation6], 16
    $region77: #{tpu_custom_call.1} parent=1 // pred_fallthru
      _
    // Predicated region
    $region78: #{tpu_custom_call.1} parent=1 // pred_check
      _
    $region79: #{tpu_custom_call.1} parent=1 // pred_check_branch
      %118 = sbr.rel (0) target = $region81
    $region80: #{tpu_custom_call.1} parent=1 // pred_region
      %119 = dma.done [#allocation9], 128
    $region81: #{tpu_custom_call.1} parent=1 // pred_fallthru
      _
    // Predicated region
    $region82: #{tpu_custom_call.1} parent=1 // pred_check
      _
    $region83: #{tpu_custom_call.1} parent=1 // pred_check_branch
      %121 = sbr.rel (0) target = $region85
    $region84: #{tpu_custom_call.1} parent=1 // pred_region
      %122 = dma.done [#allocation9], 16
    $region85: #{tpu_custom_call.1} parent=1 // pred_fallthru
      _
    // Predicated region
    $region86: #{tpu_custom_call.1} parent=1 // pred_check
      _
    $region87: #{tpu_custom_call.1} parent=1 // pred_check_branch
      %124 = sbr.rel (0) target = $region89
    $region88: #{tpu_custom_call.1} parent=1 // pred_region
      %125 = dma.done [#allocation12], 1024
    $region89: #{tpu_custom_call.1} parent=1 // pred_fallthru
      _
    %v126 = vld [vmem:[%s2] sm:$0xf]
    %v127 = vld [vmem:[%s2 + $0x4] sm:$0xf]
    %v128 = vunpack.c.l.bf16 %v126
    %v129 = vunpack.c.l.bf16 %v127
    %v130 = vld [vmem:[%s3] sm:$0xf]
    %v131 = vld [vmem:[%s3 + $0x4] sm:$0xf]
    %v132 = vunpack.c.l.bf16 %v130
    %v133 = vunpack.c.l.bf16 %v131
    %v134 = vld [vmem:[#allocation5] sm:$0xf]
    %v135 = vunpack.c.l.bf16 %v134
    %v136 = vld [vmem:[#allocation2] sm:$0xff]
    %v137 = vld [vmem:[%s10] sm:$0xff]
    %v138 = vld [vmem:[%s10 + $0x8] sm:$0xff]
    %v139 = vld [vmem:[%s10 + $0x10] sm:$0xff]
    %v140 = vld [vmem:[%s10 + $0x18] sm:$0xff]
    %v141 = vld [vmem:[%s11] sm:$0x1]
    %v142 = vld [vmem:[%s12] sm:$0xff]
    %v143 = vld [vmem:[%s12 + $0x8] sm:$0xff]
    %v144 = vld [vmem:[%s12 + $0x10] sm:$0xff]
    %v145 = vld [vmem:[%s12 + $0x18] sm:$0xff]
    %v146 = vld [vmem:[%s12 + $0x20] sm:$0xff]
    %v147 = vld [vmem:[%s12 + $0x28] sm:$0xff]
    %v148 = vld [vmem:[%s12 + $0x30] sm:$0xff]
    %v149 = vld [vmem:[%s12 + $0x38] sm:$0xff]
    %v150 = vld [vmem:[%s13] sm:$0x3]
    %v151 = vld [vmem:[#allocation11] sm:$0xff]
    %v152 = vld [vmem:[#allocation11 + $0x8] sm:$0xff]
    %v153 = vld [vmem:[#allocation11 + $0x10] sm:$0xff]
    %v154 = vld [vmem:[#allocation11 + $0x18] sm:$0xff]
    %v155 = vld [vmem:[%s15] sm:$0x1]
    %v156 = vld [vmem:[%s5] sm:$0xff]
    %v157 = vld [vmem:[%s5 + $0x8] sm:$0xff]
    %v158 = vld [vmem:[#allocation7] sm:$0x1]
    %v160 = vlaneseq
    %v161 = vshrl.u32 %v160, 7
    %v162 = vsub.s32 0, %v161
    %v163 = vrot.slane %v158, %v162
    %vm165 = vcmask 130048
    %v167 = vsel %vm165, %v136, 0
    %169 = vmatprep.subr.mxu0 0.0
    %170 = vmatpush1.msra.mxu0 %v156
    %171 = vmatprep.subr.mxu0 0.0
    %172 = vmatpush1.msra.mxu0 %v157
    %173 = vmatprep.subr.mxu0 0.0
    %174 = vmatpush1.msra.mxu0 0.0
    %175 = vmatprep.subr.mxu0 0.0
    %176 = vmatpush1.msra.mxu0 0.0
    %177 = vmatprep.subr.mxu0 0.0
    %178 = vmatpush1.msra.mxu0 0.0
    %179 = vmatprep.subr.mxu0 0.0
    %180 = vmatpush1.msra.mxu0 0.0
    %181 = vmatprep.subr.mxu0 0.0
    %182 = vmatpush1.msra.mxu0 0.0
    %183 = vmatprep.subr.mxu0 0.0
    %184 = vmatpush1.msra.mxu0 0.0
    %185 = vmatprep.subr.mxu0 0.0
    %186 = vmatpush1.msra.mxu0 0.0
    %187 = vmatprep.subr.mxu0 0.0
    %188 = vmatpush1.msra.mxu0 0.0
    %189 = vmatprep.subr.mxu0 0.0
    %190 = vmatpush1.msra.mxu0 0.0
    %191 = vmatprep.subr.mxu0 0.0
    %192 = vmatpush1.msra.mxu0 0.0
    %193 = vmatprep.subr.mxu0 0.0
    %194 = vmatpush1.msra.mxu0 0.0
    %195 = vmatprep.subr.mxu0 0.0
    %196 = vmatpush1.msra.mxu0 0.0
    %197 = vmatprep.subr.mxu0 0.0
    %198 = vmatpush1.msra.mxu0 0.0
    %199 = vmatprep.subr.mxu0 0.0
    %200 = vmatpush1.msra.mxu0 0.0
    %201 = vmatprep.subr.mxu0 0.0
    %202 = vmatpush1.msra.mxu0 0.0
    %203 = vmatprep.subr.mxu0 0.0
    %204 = vmatpush1.msra.mxu0 0.0
    %205 = vmatprep.subr.mxu0 0.0
    %206 = vmatpush1.msra.mxu0 0.0
    %207 = vmatprep.subr.mxu0 0.0
    %208 = vmatpush1.msra.mxu0 0.0
    %209 = vmatprep.subr.mxu0 0.0
    %210 = vmatpush1.msra.mxu0 0.0
    %211 = vmatprep.subr.mxu0 0.0
    %212 = vmatpush1.msra.mxu0 0.0
    %213 = vmatprep.subr.mxu0 0.0
    %214 = vmatpush1.msra.mxu0 0.0
    %215 = vmatprep.subr.mxu0 0.0
    %216 = vmatpush1.msra.mxu0 0.0
    %217 = vmatprep.subr.mxu0 0.0
    %218 = vmatpush1.msra.mxu0 0.0
    %219 = vmatprep.subr.mxu0 0.0
    %220 = vmatpush1.msra.mxu0 0.0
    %221 = vmatprep.subr.mxu0 0.0
    %222 = vmatpush1.msra.mxu0 0.0
    %223 = vmatprep.subr.mxu0 0.0
    %224 = vmatpush1.msra.mxu0 0.0
    %225 = vmatprep.subr.mxu0 0.0
    %226 = vmatpush1.msra.mxu0 0.0
    %227 = vmatprep.subr.mxu0 0.0
    %228 = vmatpush1.msra.mxu0 0.0
    %229 = vmatprep.subr.mxu0 0.0
    %230 = vmatpush1.msra.mxu0 0.0
    %231 = vmatprep.subr.mxu0 0.0
    %232 = vmatpush1.msra.mxu0 0.0
    %233 = vmatprep.mubr.f32.mxu0 0.0
    %234 = vmatmul.mubr.f32.gmra.mrb[0].mxu0 %v167
    %v235 = vpop.f32.mrb[0].mxu0
    %v236 = vadd.f32 %v163, %v235
    %v237 = vpop.f32.mrb[0].mxu0
    %238 = vdwg.mxu0
    %vm239 = vcmp.gt.f32.partialorder %v236, 0.0
    %v240 = vmul.f32 %v236, 0.01
    %v241 = vsel %vm239, %v236, %v240
    %v242 = vld [vmem:[%s7] sm:$0xff]
    %v243 = vld [vmem:[%s7 + $0x8] sm:$0xff]
    %244 = vmatprep.subr.mxu0 0.0
    %245 = vmatpush1.msra.mxu0 %v242
    %246 = vmatprep.subr.mxu0 0.0
    %247 = vmatpush1.msra.mxu0 %v243
    %248 = vmatprep.subr.mxu0 0.0
    %249 = vmatpush1.msra.mxu0 0.0
    %250 = vmatprep.subr.mxu0 0.0
    %251 = vmatpush1.msra.mxu0 0.0
    %252 = vmatprep.subr.mxu0 0.0
    %253 = vmatpush1.msra.mxu0 0.0
    %254 = vmatprep.subr.mxu0 0.0
    %255 = vmatpush1.msra.mxu0 0.0
    %256 = vmatprep.subr.mxu0 0.0
    %257 = vmatpush1.msra.mxu0 0.0
    %258 = vmatprep.subr.mxu0 0.0
    %259 = vmatpush1.msra.mxu0 0.0
    %260 = vmatprep.subr.mxu0 0.0
    %261 = vmatpush1.msra.mxu0 0.0
    %262 = vmatprep.subr.mxu0 0.0
    %263 = vmatpush1.msra.mxu0 0.0
    %264 = vmatprep.subr.mxu0 0.0
    %265 = vmatpush1.msra.mxu0 0.0
    %266 = vmatprep.subr.mxu0 0.0
    %267 = vmatpush1.msra.mxu0 0.0
    %268 = vmatprep.subr.mxu0 0.0
    %269 = vmatpush1.msra.mxu0 0.0
    %270 = vmatprep.subr.mxu0 0.0
    %271 = vmatpush1.msra.mxu0 0.0
    %272 = vmatprep.subr.mxu0 0.0
    %273 = vmatpush1.msra.mxu0 0.0
    %274 = vmatprep.subr.mxu0 0.0
    %275 = vmatpush1.msra.mxu0 0.0
    %276 = vmatprep.subr.mxu0 0.0
    %277 = vmatpush1.msra.mxu0 0.0
    %278 = vmatprep.subr.mxu0 0.0
    %279 = vmatpush1.msra.mxu0 0.0
    %280 = vmatprep.subr.mxu0 0.0
    %281 = vmatpush1.msra.mxu0 0.0
    %282 = vmatprep.subr.mxu0 0.0
    %283 = vmatpush1.msra.mxu0 0.0
    %284 = vmatprep.subr.mxu0 0.0
    %285 = vmatpush1.msra.mxu0 0.0
    %286 = vmatprep.subr.mxu0 0.0
    %287 = vmatpush1.msra.mxu0 0.0
    %288 = vmatprep.subr.mxu0 0.0
    %289 = vmatpush1.msra.mxu0 0.0
    %290 = vmatprep.subr.mxu0 0.0
    %291 = vmatpush1.msra.mxu0 0.0
    %292 = vmatprep.subr.mxu0 0.0
    %293 = vmatpush1.msra.mxu0 0.0
    %294 = vmatprep.subr.mxu0 0.0
    %295 = vmatpush1.msra.mxu0 0.0
    %296 = vmatprep.subr.mxu0 0.0
    %297 = vmatpush1.msra.mxu0 0.0
    %298 = vmatprep.subr.mxu0 0.0
    %299 = vmatpush1.msra.mxu0 0.0
    %300 = vmatprep.subr.mxu0 0.0
    %301 = vmatpush1.msra.mxu0 0.0
    %302 = vmatprep.subr.mxu0 0.0
    %303 = vmatpush1.msra.mxu0 0.0
    %304 = vmatprep.subr.mxu0 0.0
    %305 = vmatpush1.msra.mxu0 0.0
    %306 = vmatprep.subr.mxu0 0.0
    %307 = vmatpush1.msra.mxu0 0.0
    %308 = vmatprep.mubr.f32.mxu0 0.0
    %309 = vmatmul.mubr.f32.gmra.mrb[0].mxu0 %v167
    %v310 = vpop.f32.mrb[0].mxu0
    %v311 = vadd.f32 0.0, %v310
    %v312 = vpop.f32.mrb[0].mxu0
    %313 = vdwg.mxu0
    %v314 = vld [vmem:[%s1] sm:$0xff]
    %v315 = vld [vmem:[%s1 + $0x8] sm:$0xff]
    %v316 = vld [vmem:[#allocation8] sm:$0xff]
    %v317 = vld [vmem:[#allocation10] sm:$0x1]
    %v319 = vlaneseq
    %v320 = vshrl.u32 %v319, 7
    %v321 = vsub.s32 0, %v320
    %v322 = vrot.slane %v317, %v321
    %vm324 = vcmask 64512
    %v326 = vsel %vm324, %v314, 0
    %v329 = vsel %vm324, %v315, 0
    %331 = vmatprep.subr.mxu0 0.0
    %332 = vmatpush1.msra.mxu0 %v316
    %333 = vmatprep.subr.mxu0 0.0
    %334 = vmatpush1.msra.mxu0 0.0
    %335 = vmatprep.subr.mxu0 0.0
    %336 = vmatpush1.msra.mxu0 0.0
    %337 = vmatprep.subr.mxu0 0.0
    %338 = vmatpush1.msra.mxu0 0.0
    %339 = vmatprep.subr.mxu0 0.0
    %340 = vmatpush1.msra.mxu0 0.0
    %341 = vmatprep.subr.mxu0 0.0
    %342 = vmatpush1.msra.mxu0 0.0
    %343 = vmatprep.subr.mxu0 0.0
    %344 = vmatpush1.msra.mxu0 0.0
    %345 = vmatprep.subr.mxu0 0.0
    %346 = vmatpush1.msra.mxu0 0.0
    %347 = vmatprep.subr.mxu0 0.0
    %348 = vmatpush1.msra.mxu0 0.0
    %349 = vmatprep.subr.mxu0 0.0
    %350 = vmatpush1.msra.mxu0 0.0
    %351 = vmatprep.subr.mxu0 0.0
    %352 = vmatpush1.msra.mxu0 0.0
    %353 = vmatprep.subr.mxu0 0.0
    %354 = vmatpush1.msra.mxu0 0.0
    %355 = vmatprep.subr.mxu0 0.0
    %356 = vmatpush1.msra.mxu0 0.0
    %357 = vmatprep.subr.mxu0 0.0
    %358 = vmatpush1.msra.mxu0 0.0
    %359 = vmatprep.subr.mxu0 0.0
    %360 = vmatpush1.msra.mxu0 0.0
    %361 = vmatprep.subr.mxu0 0.0
    %362 = vmatpush1.msra.mxu0 0.0
    %363 = vmatprep.subr.mxu0 0.0
    %364 = vmatpush1.msra.mxu0 0.0
    %365 = vmatprep.subr.mxu0 0.0
    %366 = vmatpush1.msra.mxu0 0.0
    %367 = vmatprep.subr.mxu0 0.0
    %368 = vmatpush1.msra.mxu0 0.0
    %369 = vmatprep.subr.mxu0 0.0
    %370 = vmatpush1.msra.mxu0 0.0
    %371 = vmatprep.subr.mxu0 0.0
    %372 = vmatpush1.msra.mxu0 0.0
    %373 = vmatprep.subr.mxu0 0.0
    %374 = vmatpush1.msra.mxu0 0.0
    %375 = vmatprep.subr.mxu0 0.0
    %376 = vmatpush1.msra.mxu0 0.0
    %377 = vmatprep.subr.mxu0 0.0
    %378 = vmatpush1.msra.mxu0 0.0
    %379 = vmatprep.subr.mxu0 0.0
    %380 = vmatpush1.msra.mxu0 0.0
    %381 = vmatprep.subr.mxu0 0.0
    %382 = vmatpush1.msra.mxu0 0.0
    %383 = vmatprep.subr.mxu0 0.0
    %384 = vmatpush1.msra.mxu0 0.0
    %385 = vmatprep.subr.mxu0 0.0
    %386 = vmatpush1.msra.mxu0 0.0
    %387 = vmatprep.subr.mxu0 0.0
    %388 = vmatpush1.msra.mxu0 0.0
    %389 = vmatprep.subr.mxu0 0.0
    %390 = vmatpush1.msra.mxu0 0.0
    %391 = vmatprep.subr.mxu0 0.0
    %392 = vmatpush1.msra.mxu0 0.0
    %393 = vmatprep.subr.mxu0 0.0
    %394 = vmatpush1.msra.mxu0 0.0
    %395 = vmatprep.mubr.f32.mxu0 0.0
    %396 = vmatmul.mubr.f32.gmra.mrb[0].mxu0 %v326
    %v397 = vpop.f32.mrb[0].mxu0
    %v398 = vadd.f32 %v322, %v397
    %v399 = vpop.f32.mrb[0].mxu0
    %400 = vmatprep.mubr.f32.mxu0 0.0
    %401 = vmatmul.mubr.f32.gmra.mrb[0].mxu0 %v329
    %v402 = vpop.f32.mrb[0].mxu0
    %v403 = vadd.f32 %v322, %v402
    %v404 = vpop.f32.mrb[0].mxu0
    %405 = vdwg.mxu0
    %v407 = vsel %vm324, %v128, 0
    %v410 = vsel %vm324, %v129, 0
    %412 = vmatprep.subr.mxu0 0.0
    %413 = vmatpush1.msra.mxu0 %v311
    %414 = vmatprep.subr.mxu0 0.0
    %415 = vmatpush1.msra.mxu0 0.0
    %416 = vmatprep.subr.mxu0 0.0
    %417 = vmatpush1.msra.mxu0 0.0
    %418 = vmatprep.subr.mxu0 0.0
    %419 = vmatpush1.msra.mxu0 0.0
    %420 = vmatprep.subr.mxu0 0.0
    %421 = vmatpush1.msra.mxu0 0.0
    %422 = vmatprep.subr.mxu0 0.0
    %423 = vmatpush1.msra.mxu0 0.0
    %424 = vmatprep.subr.mxu0 0.0
    %425 = vmatpush1.msra.mxu0 0.0
    %426 = vmatprep.subr.mxu0 0.0
    %427 = vmatpush1.msra.mxu0 0.0
    %428 = vmatprep.subr.mxu0 0.0
    %429 = vmatpush1.msra.mxu0 0.0
    %430 = vmatprep.subr.mxu0 0.0
    %431 = vmatpush1.msra.mxu0 0.0
    %432 = vmatprep.subr.mxu0 0.0
    %433 = vmatpush1.msra.mxu0 0.0
    %434 = vmatprep.subr.mxu0 0.0
    %435 = vmatpush1.msra.mxu0 0.0
    %436 = vmatprep.subr.mxu0 0.0
    %437 = vmatpush1.msra.mxu0 0.0
    %438 = vmatprep.subr.mxu0 0.0
    %439 = vmatpush1.msra.mxu0 0.0
    %440 = vmatprep.subr.mxu0 0.0
    %441 = vmatpush1.msra.mxu0 0.0
    %442 = vmatprep.subr.mxu0 0.0
    %443 = vmatpush1.msra.mxu0 0.0
    %444 = vmatprep.subr.mxu0 0.0
    %445 = vmatpush1.msra.mxu0 0.0
    %446 = vmatprep.subr.mxu0 0.0
    %447 = vmatpush1.msra.mxu0 0.0
    %448 = vmatprep.subr.mxu0 0.0
    %449 = vmatpush1.msra.mxu0 0.0
    %450 = vmatprep.subr.mxu0 0.0
    %451 = vmatpush1.msra.mxu0 0.0
    %452 = vmatprep.subr.mxu0 0.0
    %453 = vmatpush1.msra.mxu0 0.0
    %454 = vmatprep.subr.mxu0 0.0
    %455 = vmatpush1.msra.mxu0 0.0
    %456 = vmatprep.subr.mxu0 0.0
    %457 = vmatpush1.msra.mxu0 0.0
    %458 = vmatprep.subr.mxu0 0.0
    %459 = vmatpush1.msra.mxu0 0.0
    %460 = vmatprep.subr.mxu0 0.0
    %461 = vmatpush1.msra.mxu0 0.0
    %462 = vmatprep.subr.mxu0 0.0
    %463 = vmatpush1.msra.mxu0 0.0
    %464 = vmatprep.subr.mxu0 0.0
    %465 = vmatpush1.msra.mxu0 0.0
    %466 = vmatprep.subr.mxu0 0.0
    %467 = vmatpush1.msra.mxu0 0.0
    %468 = vmatprep.subr.mxu0 0.0
    %469 = vmatpush1.msra.mxu0 0.0
    %470 = vmatprep.subr.mxu0 0.0
    %471 = vmatpush1.msra.mxu0 0.0
    %472 = vmatprep.subr.mxu0 0.0
    %473 = vmatpush1.msra.mxu0 0.0
    %474 = vmatprep.subr.mxu0 0.0
    %475 = vmatpush1.msra.mxu0 0.0
    %476 = vmatprep.mubr.f32.mxu0 0.0
    %477 = vmatmul.mubr.f32.gmra.mrb[0].mxu0 %v407
    %v478 = vpop.f32.mrb[0].mxu0
    %v479 = vadd.f32 %v398, %v478
    %v480 = vpop.f32.mrb[0].mxu0
    %481 = vmatprep.mubr.f32.mxu0 0.0
    %482 = vmatmul.mubr.f32.gmra.mrb[0].mxu0 %v410
    %v483 = vpop.f32.mrb[0].mxu0
    %v484 = vadd.f32 %v403, %v483
    %v485 = vpop.f32.mrb[0].mxu0
    %486 = vdwg.mxu0
    %vm487 = vcmp.gt.f32.partialorder %v479, 0.0
    %vm488 = vcmp.gt.f32.partialorder %v484, 0.0
    %v489 = vmul.f32 %v479, 0.01
    %v490 = vmul.f32 %v484, 0.01
    %v491 = vsel %vm487, %v479, %v489
    %v492 = vsel %vm488, %v484, %v490
    %vm493 = vcmask 261120
    %v495 = vsel %vm493, %v491, 0
    %v498 = vsel %vm493, %v492, 0
    %500 = vmatprep.subr.mxu0 0.0
    %501 = vmatpush1.msra.mxu0 %v137
    %502 = vmatprep.subr.mxu0 0.0
    %503 = vmatpush1.msra.mxu0 %v138
    %504 = vmatprep.subr.mxu0 0.0
    %505 = vmatpush1.msra.mxu0 %v139
    %506 = vmatprep.subr.mxu0 0.0
    %507 = vmatpush1.msra.mxu0 %v140
    %508 = vmatprep.subr.mxu0 0.0
    %509 = vmatpush1.msra.mxu0 0.0
    %510 = vmatprep.subr.mxu0 0.0
    %511 = vmatpush1.msra.mxu0 0.0
    %512 = vmatprep.subr.mxu0 0.0
    %513 = vmatpush1.msra.mxu0 0.0
    %514 = vmatprep.subr.mxu0 0.0
    %515 = vmatpush1.msra.mxu0 0.0
    %516 = vmatprep.subr.mxu0 0.0
    %517 = vmatpush1.msra.mxu0 0.0
    %518 = vmatprep.subr.mxu0 0.0
    %519 = vmatpush1.msra.mxu0 0.0
    %520 = vmatprep.subr.mxu0 0.0
    %521 = vmatpush1.msra.mxu0 0.0
    %522 = vmatprep.subr.mxu0 0.0
    %523 = vmatpush1.msra.mxu0 0.0
    %524 = vmatprep.subr.mxu0 0.0
    %525 = vmatpush1.msra.mxu0 0.0
    %526 = vmatprep.subr.mxu0 0.0
    %527 = vmatpush1.msra.mxu0 0.0
    %528 = vmatprep.subr.mxu0 0.0
    %529 = vmatpush1.msra.mxu0 0.0
    %530 = vmatprep.subr.mxu0 0.0
    %531 = vmatpush1.msra.mxu0 0.0
    %532 = vmatprep.subr.mxu0 0.0
    %533 = vmatpush1.msra.mxu0 0.0
    %534 = vmatprep.subr.mxu0 0.0
    %535 = vmatpush1.msra.mxu0 0.0
    %536 = vmatprep.subr.mxu0 0.0
    %537 = vmatpush1.msra.mxu0 0.0
    %538 = vmatprep.subr.mxu0 0.0
    %539 = vmatpush1.msra.mxu0 0.0
    %540 = vmatprep.subr.mxu0 0.0
    %541 = vmatpush1.msra.mxu0 0.0
    %542 = vmatprep.subr.mxu0 0.0
    %543 = vmatpush1.msra.mxu0 0.0
    %544 = vmatprep.subr.mxu0 0.0
    %545 = vmatpush1.msra.mxu0 0.0
    %546 = vmatprep.subr.mxu0 0.0
    %547 = vmatpush1.msra.mxu0 0.0
    %548 = vmatprep.subr.mxu0 0.0
    %549 = vmatpush1.msra.mxu0 0.0
    %550 = vmatprep.subr.mxu0 0.0
    %551 = vmatpush1.msra.mxu0 0.0
    %552 = vmatprep.subr.mxu0 0.0
    %553 = vmatpush1.msra.mxu0 0.0
    %554 = vmatprep.subr.mxu0 0.0
    %555 = vmatpush1.msra.mxu0 0.0
    %556 = vmatprep.subr.mxu0 0.0
    %557 = vmatpush1.msra.mxu0 0.0
    %558 = vmatprep.subr.mxu0 0.0
    %559 = vmatpush1.msra.mxu0 0.0
    %560 = vmatprep.subr.mxu0 0.0
    %561 = vmatpush1.msra.mxu0 0.0
    %562 = vmatprep.subr.mxu0 0.0
    %563 = vmatpush1.msra.mxu0 0.0
    %564 = vmatprep.mubr.f32.mxu0 0.0
    %565 = vmatmul.mubr.f32.gmra.mrb[0].mxu0 %v495
    %v566 = vpop.f32.mrb[0].mxu0
    %v567 = vadd.f32 0.0, %v566
    %v568 = vpop.f32.mrb[0].mxu0
    %569 = vmatprep.mubr.f32.mxu0 0.0
    %570 = vmatmul.mubr.f32.gmra.mrb[0].mxu0 %v498
    %v571 = vpop.f32.mrb[0].mxu0
    %v572 = vadd.f32 0.0, %v571
    %v573 = vpop.f32.mrb[0].mxu0
    %574 = vdwg.mxu0
    %v576 = vlaneseq
    %v577 = vshrl.u32 %v576, 7
    %v578 = vsub.s32 0, %v577
    %v579 = vrot.slane %v150, %v578
    %v580 = vlaneseq
    %v581 = vshrl.u32 %v580, 7
    %v582 = vsub.s32 1, %v581
    %v583 = vrot.slane %v150, %v582
    %v587 = vsel %vm493, %v241, 0
    %589 = vmatprep.subr.mxu0 %v143
    %590 = vmatpush1.msra.mxu0 %v142
    %591 = vmatprep.subr.mxu0 %v145
    %592 = vmatpush1.msra.mxu0 %v144
    %593 = vmatprep.subr.mxu0 %v147
    %594 = vmatpush1.msra.mxu0 %v146
    %595 = vmatprep.subr.mxu0 %v149
    %596 = vmatpush1.msra.mxu0 %v148
    %597 = vmatprep.subr.mxu0 0.0
    %598 = vmatpush1.msra.mxu0 0.0
    %599 = vmatprep.subr.mxu0 0.0
    %600 = vmatpush1.msra.mxu0 0.0
    %601 = vmatprep.subr.mxu0 0.0
    %602 = vmatpush1.msra.mxu0 0.0
    %603 = vmatprep.subr.mxu0 0.0
    %604 = vmatpush1.msra.mxu0 0.0
    %605 = vmatprep.subr.mxu0 0.0
    %606 = vmatpush1.msra.mxu0 0.0
    %607 = vmatprep.subr.mxu0 0.0
    %608 = vmatpush1.msra.mxu0 0.0
    %609 = vmatprep.subr.mxu0 0.0
    %610 = vmatpush1.msra.mxu0 0.0
    %611 = vmatprep.subr.mxu0 0.0
    %612 = vmatpush1.msra.mxu0 0.0
    %613 = vmatprep.subr.mxu0 0.0
    %614 = vmatpush1.msra.mxu0 0.0
    %615 = vmatprep.subr.mxu0 0.0
    %616 = vmatpush1.msra.mxu0 0.0
    %617 = vmatprep.subr.mxu0 0.0
    %618 = vmatpush1.msra.mxu0 0.0
    %619 = vmatprep.subr.mxu0 0.0
    %620 = vmatpush1.msra.mxu0 0.0
    %621 = vmatprep.subr.mxu0 0.0
    %622 = vmatpush1.msra.mxu0 0.0
    %623 = vmatprep.subr.mxu0 0.0
    %624 = vmatpush1.msra.mxu0 0.0
    %625 = vmatprep.subr.mxu0 0.0
    %626 = vmatpush1.msra.mxu0 0.0
    %627 = vmatprep.subr.mxu0 0.0
    %628 = vmatpush1.msra.mxu0 0.0
    %629 = vmatprep.subr.mxu0 0.0
    %630 = vmatpush1.msra.mxu0 0.0
    %631 = vmatprep.subr.mxu0 0.0
    %632 = vmatpush1.msra.mxu0 0.0
    %633 = vmatprep.subr.mxu0 0.0
    %634 = vmatpush1.msra.mxu0 0.0
    %635 = vmatprep.subr.mxu0 0.0
    %636 = vmatpush1.msra.mxu0 0.0
    %637 = vmatprep.subr.mxu0 0.0
    %638 = vmatpush1.msra.mxu0 0.0
    %639 = vmatprep.subr.mxu0 0.0
    %640 = vmatpush1.msra.mxu0 0.0
    %641 = vmatprep.subr.mxu0 0.0
    %642 = vmatpush1.msra.mxu0 0.0
    %643 = vmatprep.subr.mxu0 0.0
    %644 = vmatpush1.msra.mxu0 0.0
    %645 = vmatprep.subr.mxu0 0.0
    %646 = vmatpush1.msra.mxu0 0.0
    %647 = vmatprep.subr.mxu0 0.0
    %648 = vmatpush1.msra.mxu0 0.0
    %649 = vmatprep.subr.mxu0 0.0
    %650 = vmatpush1.msra.mxu0 0.0
    %651 = vmatprep.subr.mxu0 0.0
    %652 = vmatpush1.msra.mxu0 0.0
    %653 = vmatprep.mubr.f32.mxu0 0.0
    %654 = vmatmul.mubr.f32.gmra.mrb[0].mxu0 %v587
    %v655 = vpop.f32.mrb[0].mxu0
    %v656 = vadd.f32 %v579, %v655
    %v657 = vpop.f32.mrb[0].mxu0
    %v658 = vadd.f32 %v583, %v657
    %659 = vdwg.mxu0
    %v661 = vsel %vm324, %v132, 0
    %v664 = vsel %vm324, %v133, 0
    %666 = vmatprep.subr.mxu0 %v658
    %667 = vmatpush1.msra.mxu0 %v656
    %668 = vmatprep.subr.mxu0 0.0
    %669 = vmatpush1.msra.mxu0 0.0
    %670 = vmatprep.subr.mxu0 0.0
    %671 = vmatpush1.msra.mxu0 0.0
    %672 = vmatprep.subr.mxu0 0.0
    %673 = vmatpush1.msra.mxu0 0.0
    %674 = vmatprep.subr.mxu0 0.0
    %675 = vmatpush1.msra.mxu0 0.0
    %676 = vmatprep.subr.mxu0 0.0
    %677 = vmatpush1.msra.mxu0 0.0
    %678 = vmatprep.subr.mxu0 0.0
    %679 = vmatpush1.msra.mxu0 0.0
    %680 = vmatprep.subr.mxu0 0.0
    %681 = vmatpush1.msra.mxu0 0.0
    %682 = vmatprep.subr.mxu0 0.0
    %683 = vmatpush1.msra.mxu0 0.0
    %684 = vmatprep.subr.mxu0 0.0
    %685 = vmatpush1.msra.mxu0 0.0
    %686 = vmatprep.subr.mxu0 0.0
    %687 = vmatpush1.msra.mxu0 0.0
    %688 = vmatprep.subr.mxu0 0.0
    %689 = vmatpush1.msra.mxu0 0.0
    %690 = vmatprep.subr.mxu0 0.0
    %691 = vmatpush1.msra.mxu0 0.0
    %692 = vmatprep.subr.mxu0 0.0
    %693 = vmatpush1.msra.mxu0 0.0
    %694 = vmatprep.subr.mxu0 0.0
    %695 = vmatpush1.msra.mxu0 0.0
    %696 = vmatprep.subr.mxu0 0.0
    %697 = vmatpush1.msra.mxu0 0.0
    %698 = vmatprep.subr.mxu0 0.0
    %699 = vmatpush1.msra.mxu0 0.0
    %700 = vmatprep.subr.mxu0 0.0
    %701 = vmatpush1.msra.mxu0 0.0
    %702 = vmatprep.subr.mxu0 0.0
    %703 = vmatpush1.msra.mxu0 0.0
    %704 = vmatprep.subr.mxu0 0.0
    %705 = vmatpush1.msra.mxu0 0.0
    %706 = vmatprep.subr.mxu0 0.0
    %707 = vmatpush1.msra.mxu0 0.0
    %708 = vmatprep.subr.mxu0 0.0
    %709 = vmatpush1.msra.mxu0 0.0
    %710 = vmatprep.subr.mxu0 0.0
    %711 = vmatpush1.msra.mxu0 0.0
    %712 = vmatprep.subr.mxu0 0.0
    %713 = vmatpush1.msra.mxu0 0.0
    %714 = vmatprep.subr.mxu0 0.0
    %715 = vmatpush1.msra.mxu0 0.0
    %716 = vmatprep.subr.mxu0 0.0
    %717 = vmatpush1.msra.mxu0 0.0
    %718 = vmatprep.subr.mxu0 0.0
    %719 = vmatpush1.msra.mxu0 0.0
    %720 = vmatprep.subr.mxu0 0.0
    %721 = vmatpush1.msra.mxu0 0.0
    %722 = vmatprep.subr.mxu0 0.0
    %723 = vmatpush1.msra.mxu0 0.0
    %724 = vmatprep.subr.mxu0 0.0
    %725 = vmatpush1.msra.mxu0 0.0
    %726 = vmatprep.subr.mxu0 0.0
    %727 = vmatpush1.msra.mxu0 0.0
    %728 = vmatprep.subr.mxu0 0.0
    %729 = vmatpush1.msra.mxu0 0.0
    %730 = vmatprep.mubr.f32.mxu0 0.0
    %731 = vmatmul.mubr.f32.gmra.mrb[0].mxu0 %v661
    %v732 = vpop.f32.mrb[0].mxu0
    %v733 = vadd.f32 0.0, %v732
    %v734 = vpop.f32.mrb[0].mxu0
    %v735 = vadd.f32 0.0, %v734
    %736 = vmatprep.mubr.f32.mxu0 0.0
    %737 = vmatmul.mubr.f32.gmra.mrb[0].mxu0 %v664
    %v738 = vpop.f32.mrb[0].mxu0
    %v739 = vadd.f32 0.0, %v738
    %v740 = vpop.f32.mrb[0].mxu0
    %v741 = vadd.f32 0.0, %v740
    %742 = vdwg.mxu0
    %743 = vmatprep.subr.mxu0 0.0
    %744 = vmatpush1.msra.mxu0 %v241
    %745 = vmatprep.subr.mxu0 0.0
    %746 = vmatpush1.msra.mxu0 0.0
    %747 = vmatprep.subr.mxu0 0.0
    %748 = vmatpush1.msra.mxu0 0.0
    %749 = vmatprep.subr.mxu0 0.0
    %750 = vmatpush1.msra.mxu0 0.0
    %751 = vmatprep.subr.mxu0 0.0
    %752 = vmatpush1.msra.mxu0 0.0
    %753 = vmatprep.subr.mxu0 0.0
    %754 = vmatpush1.msra.mxu0 0.0
    %755 = vmatprep.subr.mxu0 0.0
    %756 = vmatpush1.msra.mxu0 0.0
    %757 = vmatprep.subr.mxu0 0.0
    %758 = vmatpush1.msra.mxu0 0.0
    %759 = vmatprep.subr.mxu0 0.0
    %760 = vmatpush1.msra.mxu0 0.0
    %761 = vmatprep.subr.mxu0 0.0
    %762 = vmatpush1.msra.mxu0 0.0
    %763 = vmatprep.subr.mxu0 0.0
    %764 = vmatpush1.msra.mxu0 0.0
    %765 = vmatprep.subr.mxu0 0.0
    %766 = vmatpush1.msra.mxu0 0.0
    %767 = vmatprep.subr.mxu0 0.0
    %768 = vmatpush1.msra.mxu0 0.0
    %769 = vmatprep.subr.mxu0 0.0
    %770 = vmatpush1.msra.mxu0 0.0
    %771 = vmatprep.subr.mxu0 0.0
    %772 = vmatpush1.msra.mxu0 0.0
    %773 = vmatprep.subr.mxu0 0.0
    %774 = vmatpush1.msra.mxu0 0.0
    %775 = vmatprep.subr.mxu0 0.0
    %776 = vmatpush1.msra.mxu0 0.0
    %777 = vmatprep.subr.mxu0 0.0
    %778 = vmatpush1.msra.mxu0 0.0
    %779 = vmatprep.subr.mxu0 0.0
    %780 = vmatpush1.msra.mxu0 0.0
    %781 = vmatprep.subr.mxu0 0.0
    %782 = vmatpush1.msra.mxu0 0.0
    %783 = vmatprep.subr.mxu0 0.0
    %784 = vmatpush1.msra.mxu0 0.0
    %785 = vmatprep.subr.mxu0 0.0
    %786 = vmatpush1.msra.mxu0 0.0
    %787 = vmatprep.subr.mxu0 0.0
    %788 = vmatpush1.msra.mxu0 0.0
    %789 = vmatprep.subr.mxu0 0.0
    %790 = vmatpush1.msra.mxu0 0.0
    %791 = vmatprep.subr.mxu0 0.0
    %792 = vmatpush1.msra.mxu0 0.0
    %793 = vmatprep.subr.mxu0 0.0
    %794 = vmatpush1.msra.mxu0 0.0
    %795 = vmatprep.subr.mxu0 0.0
    %796 = vmatpush1.msra.mxu0 0.0
    %797 = vmatprep.subr.mxu0 0.0
    %798 = vmatpush1.msra.mxu0 0.0
    %799 = vmatprep.subr.mxu0 0.0
    %800 = vmatpush1.msra.mxu0 0.0
    %801 = vmatprep.subr.mxu0 0.0
    %802 = vmatpush1.msra.mxu0 0.0
    %803 = vmatprep.subr.mxu0 0.0
    %804 = vmatpush1.msra.mxu0 0.0
    %805 = vmatprep.subr.mxu0 0.0
    %806 = vmatpush1.msra.mxu0 0.0
    %807 = vmatprep.mubr.f32.mxu0 0.0
    %808 = vmatmul.mubr.f32.gmra.mrb[0].mxu0 %v661
    %v809 = vpop.f32.mrb[0].mxu0
    %v810 = vadd.f32 0.0, %v809
    %v811 = vpop.f32.mrb[0].mxu0
    %812 = vmatprep.mubr.f32.mxu0 0.0
    %813 = vmatmul.mubr.f32.gmra.mrb[0].mxu0 %v664
    %v814 = vpop.f32.mrb[0].mxu0
    %v815 = vadd.f32 0.0, %v814
    %v816 = vpop.f32.mrb[0].mxu0
    %817 = vdwg.mxu0
    %v818 = vadd.f32 %v735, %v567
    %v819 = vadd.f32 %v741, %v572
    %v821 = vlaneseq
    %v822 = vshrl.u32 %v821, 7
    %v823 = vsub.s32 0, %v822
    %v824 = vrot.slane %v141, %v823
    %v826 = vadd.f32 %v818, %v824
    %v827 = vadd.f32 %v819, %v824
    %vm828 = vcmp.gt.f32.partialorder %v826, 0.0
    %vm829 = vcmp.gt.f32.partialorder %v827, 0.0
    %v830 = vmul.f32 %v826, 0.01
    %v831 = vmul.f32 %v827, 0.01
    %v832 = vsel %vm828, %v826, %v830
    %v833 = vsel %vm829, %v827, %v831
    %vm834 = vcmask 7168
    %v835 = vsel %vm834, %v832, -inf
    %v836 = vsel %vm834, %v833, -inf
    %v837 = vmax.f32 %v835, %v836
    %v838 = vrot.slane %v837, 4
    %v839 = vmax.f32 %v837, %v838
    %v840 = vrot.slane %v839, 2
    %v841 = vmax.f32 %v839, %v840
    %v842 = vrot.slane %v841, 1
    %v843 = vmax.f32 %v841, %v842
    %v844 = vsub.f32 %v832, %v843
    %v845 = vsub.f32 %v833, %v843
    %v846 = vmul.f32 %v844, 1.442695
    %v847 = vpow.pop %v846
    %v848 = vmul.f32 %v845, 1.442695
    %v849 = vpow.pop %v848
    %v851 = vsel %vm165, %v135, 0
    %853 = vmatprep.subr.mxu0 0.0
    %854 = vmatpush1.msra.mxu0 %v847
    %855 = vmatprep.subr.mxu0 0.0
    %856 = vmatpush1.msra.mxu0 %v849
    %857 = vmatprep.subr.mxu0 0.0
    %858 = vmatpush1.msra.mxu0 0.0
    %859 = vmatprep.subr.mxu0 0.0
    %860 = vmatpush1.msra.mxu0 0.0
    %861 = vmatprep.subr.mxu0 0.0
    %862 = vmatpush1.msra.mxu0 0.0
    %863 = vmatprep.subr.mxu0 0.0
    %864 = vmatpush1.msra.mxu0 0.0
    %865 = vmatprep.subr.mxu0 0.0
    %866 = vmatpush1.msra.mxu0 0.0
    %867 = vmatprep.subr.mxu0 0.0
    %868 = vmatpush1.msra.mxu0 0.0
    %869 = vmatprep.subr.mxu0 0.0
    %870 = vmatpush1.msra.mxu0 0.0
    %871 = vmatprep.subr.mxu0 0.0
    %872 = vmatpush1.msra.mxu0 0.0
    %873 = vmatprep.subr.mxu0 0.0
    %874 = vmatpush1.msra.mxu0 0.0
    %875 = vmatprep.subr.mxu0 0.0
    %876 = vmatpush1.msra.mxu0 0.0
    %877 = vmatprep.subr.mxu0 0.0
    %878 = vmatpush1.msra.mxu0 0.0
    %879 = vmatprep.subr.mxu0 0.0
    %880 = vmatpush1.msra.mxu0 0.0
    %881 = vmatprep.subr.mxu0 0.0
    %882 = vmatpush1.msra.mxu0 0.0
    %883 = vmatprep.subr.mxu0 0.0
    %884 = vmatpush1.msra.mxu0 0.0
    %885 = vmatprep.subr.mxu0 0.0
    %886 = vmatpush1.msra.mxu0 0.0
    %887 = vmatprep.subr.mxu0 0.0
    %888 = vmatpush1.msra.mxu0 0.0
    %889 = vmatprep.subr.mxu0 0.0
    %890 = vmatpush1.msra.mxu0 0.0
    %891 = vmatprep.subr.mxu0 0.0
    %892 = vmatpush1.msra.mxu0 0.0
    %893 = vmatprep.subr.mxu0 0.0
    %894 = vmatpush1.msra.mxu0 0.0
    %895 = vmatprep.subr.mxu0 0.0
    %896 = vmatpush1.msra.mxu0 0.0
    %897 = vmatprep.subr.mxu0 0.0
    %898 = vmatpush1.msra.mxu0 0.0
    %899 = vmatprep.subr.mxu0 0.0
    %900 = vmatpush1.msra.mxu0 0.0
    %901 = vmatprep.subr.mxu0 0.0
    %902 = vmatpush1.msra.mxu0 0.0
    %903 = vmatprep.subr.mxu0 0.0
    %904 = vmatpush1.msra.mxu0 0.0
    %905 = vmatprep.subr.mxu0 0.0
    %906 = vmatpush1.msra.mxu0 0.0
    %907 = vmatprep.subr.mxu0 0.0
    %908 = vmatpush1.msra.mxu0 0.0
    %909 = vmatprep.subr.mxu0 0.0
    %910 = vmatpush1.msra.mxu0 0.0
    %911 = vmatprep.subr.mxu0 0.0
    %912 = vmatpush1.msra.mxu0 0.0
    %913 = vmatprep.subr.mxu0 0.0
    %914 = vmatpush1.msra.mxu0 0.0
    %915 = vmatprep.subr.mxu0 0.0
    %916 = vmatpush1.msra.mxu0 0.0
    %917 = vmatprep.mubr.f32.mxu0 0.0
    %918 = vmatmul.mubr.f32.gmra.mrb[0].mxu0 %v851
    %v919 = vpop.f32.mrb[0].mxu0
    %v920 = vadd.f32 0.0, %v919
    %v921 = vpop.f32.mrb[0].mxu0
    %922 = vdwg.mxu0
    %923 = vmatprep.subr.mxu0 0.0
    %924 = vmatpush1.msra.mxu0 %v920
    %925 = vmatprep.subr.mxu0 0.0
    %926 = vmatpush1.msra.mxu0 0.0
    %927 = vmatprep.subr.mxu0 0.0
    %928 = vmatpush1.msra.mxu0 0.0
    %929 = vmatprep.subr.mxu0 0.0
    %930 = vmatpush1.msra.mxu0 0.0
    %931 = vmatprep.subr.mxu0 0.0
    %932 = vmatpush1.msra.mxu0 0.0
    %933 = vmatprep.subr.mxu0 0.0
    %934 = vmatpush1.msra.mxu0 0.0
    %935 = vmatprep.subr.mxu0 0.0
    %936 = vmatpush1.msra.mxu0 0.0
    %937 = vmatprep.subr.mxu0 0.0
    %938 = vmatpush1.msra.mxu0 0.0
    %939 = vmatprep.subr.mxu0 0.0
    %940 = vmatpush1.msra.mxu0 0.0
    %941 = vmatprep.subr.mxu0 0.0
    %942 = vmatpush1.msra.mxu0 0.0
    %943 = vmatprep.subr.mxu0 0.0
    %944 = vmatpush1.msra.mxu0 0.0
    %945 = vmatprep.subr.mxu0 0.0
    %946 = vmatpush1.msra.mxu0 0.0
    %947 = vmatprep.subr.mxu0 0.0
    %948 = vmatpush1.msra.mxu0 0.0
    %949 = vmatprep.subr.mxu0 0.0
    %950 = vmatpush1.msra.mxu0 0.0
    %951 = vmatprep.subr.mxu0 0.0
    %952 = vmatpush1.msra.mxu0 0.0
    %953 = vmatprep.subr.mxu0 0.0
    %954 = vmatpush1.msra.mxu0 0.0
    %955 = vmatprep.subr.mxu0 0.0
    %956 = vmatpush1.msra.mxu0 0.0
    %957 = vmatprep.subr.mxu0 0.0
    %958 = vmatpush1.msra.mxu0 0.0
    %959 = vmatprep.subr.mxu0 0.0
    %960 = vmatpush1.msra.mxu0 0.0
    %961 = vmatprep.subr.mxu0 0.0
    %962 = vmatpush1.msra.mxu0 0.0
    %963 = vmatprep.subr.mxu0 0.0
    %964 = vmatpush1.msra.mxu0 0.0
    %965 = vmatprep.subr.mxu0 0.0
    %966 = vmatpush1.msra.mxu0 0.0
    %967 = vmatprep.subr.mxu0 0.0
    %968 = vmatpush1.msra.mxu0 0.0
    %969 = vmatprep.subr.mxu0 0.0
    %970 = vmatpush1.msra.mxu0 0.0
    %971 = vmatprep.subr.mxu0 0.0
    %972 = vmatpush1.msra.mxu0 0.0
    %973 = vmatprep.subr.mxu0 0.0
    %974 = vmatpush1.msra.mxu0 0.0
    %975 = vmatprep.subr.mxu0 0.0
    %976 = vmatpush1.msra.mxu0 0.0
    %977 = vmatprep.subr.mxu0 0.0
    %978 = vmatpush1.msra.mxu0 0.0
    %979 = vmatprep.subr.mxu0 0.0
    %980 = vmatpush1.msra.mxu0 0.0
    %981 = vmatprep.subr.mxu0 0.0
    %982 = vmatpush1.msra.mxu0 0.0
    %983 = vmatprep.subr.mxu0 0.0
    %984 = vmatpush1.msra.mxu0 0.0
    %985 = vmatprep.subr.mxu0 0.0
    %986 = vmatpush1.msra.mxu0 0.0
    %987 = vmatprep.mubr.f32.mxu0 0.0
    %988 = vmatmul.mubr.f32.gmra.mrb[0].mxu0 %v661
    %v989 = vpop.f32.mrb[0].mxu0
    %v990 = vadd.f32 1e-16, %v989
    %v991 = vpop.f32.mrb[0].mxu0
    %992 = vmatprep.mubr.f32.mxu0 0.0
    %993 = vmatmul.mubr.f32.gmra.mrb[0].mxu0 %v664
    %v994 = vpop.f32.mrb[0].mxu0
    %v995 = vadd.f32 1e-16, %v994
    %v996 = vpop.f32.mrb[0].mxu0
    %997 = vdwg.mxu0
    %v998 = vrcp.pop %v990
    %v999 = vrcp.pop %v995
    %v1000 = vmul.f32 %v847, %v998
    %v1001 = vmul.f32 %v849, %v999
    %1003 = vset.pattern.permute.xlu0 0
    %1004 = vperm.xlu0 %1003, %v1000
    %v1005 = vpop.permute.xlu0 %1004
    %1008 = vset.pattern.permute.xlu0 0
    %1009 = vperm.xlu0 %1008, %v1001
    %v1010 = vpop.permute.xlu0 %1009
    %v1012 = vmul.f32 %v1005, %v733
    %v1013 = vmul.f32 %v1010, %v739
    %vm1014 = vcmp.gt.f32.partialorder %v1012, 0.0
    %vm1015 = vcmp.gt.f32.partialorder %v1013, 0.0
    %v1016 = vmin.f32 %v1012, 0.0
    %v1017 = vmin.f32 %v1013, 0.0
    %v1018 = vmul.f32 %v1016, 1.442695
    %v1019 = vpow.pop %v1018
    %v1020 = vmul.f32 %v1017, 1.442695
    %v1021 = vpow.pop %v1020
    %v1022 = vsub.f32 %v1019, 1.0
    %v1023 = vsub.f32 %v1021, 1.0
    %v1024 = vsel %vm1014, %v1012, %v1022
    %v1025 = vsel %vm1015, %v1013, %v1023
    %v1027 = vlaneseq
    %v1028 = vshrl.u32 %v1027, 7
    %v1029 = vsub.s32 0, %v1028
    %v1030 = vrot.slane %v155, %v1029
    %v1033 = vsel %vm493, %v1024, 0
    %v1036 = vsel %vm493, %v1025, 0
    %1038 = vmatprep.subr.mxu0 0.0
    %1039 = vmatpush1.msra.mxu0 %v151
    %1040 = vmatprep.subr.mxu0 0.0
    %1041 = vmatpush1.msra.mxu0 %v152
    %1042 = vmatprep.subr.mxu0 0.0
    %1043 = vmatpush1.msra.mxu0 %v153
    %1044 = vmatprep.subr.mxu0 0.0
    %1045 = vmatpush1.msra.mxu0 %v154
    %1046 = vmatprep.subr.mxu0 0.0
    %1047 = vmatpush1.msra.mxu0 0.0
    %1048 = vmatprep.subr.mxu0 0.0
    %1049 = vmatpush1.msra.mxu0 0.0
    %1050 = vmatprep.subr.mxu0 0.0
    %1051 = vmatpush1.msra.mxu0 0.0
    %1052 = vmatprep.subr.mxu0 0.0
    %1053 = vmatpush1.msra.mxu0 0.0
    %1054 = vmatprep.subr.mxu0 0.0
    %1055 = vmatpush1.msra.mxu0 0.0
    %1056 = vmatprep.subr.mxu0 0.0
    %1057 = vmatpush1.msra.mxu0 0.0
    %1058 = vmatprep.subr.mxu0 0.0
    %1059 = vmatpush1.msra.mxu0 0.0
    %1060 = vmatprep.subr.mxu0 0.0
    %1061 = vmatpush1.msra.mxu0 0.0
    %1062 = vmatprep.subr.mxu0 0.0
    %1063 = vmatpush1.msra.mxu0 0.0
    %1064 = vmatprep.subr.mxu0 0.0
    %1065 = vmatpush1.msra.mxu0 0.0
    %1066 = vmatprep.subr.mxu0 0.0
    %1067 = vmatpush1.msra.mxu0 0.0
    %1068 = vmatprep.subr.mxu0 0.0
    %1069 = vmatpush1.msra.mxu0 0.0
    %1070 = vmatprep.subr.mxu0 0.0
    %1071 = vmatpush1.msra.mxu0 0.0
    %1072 = vmatprep.subr.mxu0 0.0
    %1073 = vmatpush1.msra.mxu0 0.0
    %1074 = vmatprep.subr.mxu0 0.0
    %1075 = vmatpush1.msra.mxu0 0.0
    %1076 = vmatprep.subr.mxu0 0.0
    %1077 = vmatpush1.msra.mxu0 0.0
    %1078 = vmatprep.subr.mxu0 0.0
    %1079 = vmatpush1.msra.mxu0 0.0
    %1080 = vmatprep.subr.mxu0 0.0
    %1081 = vmatpush1.msra.mxu0 0.0
    %1082 = vmatprep.subr.mxu0 0.0
    %1083 = vmatpush1.msra.mxu0 0.0
    %1084 = vmatprep.subr.mxu0 0.0
    %1085 = vmatpush1.msra.mxu0 0.0
    %1086 = vmatprep.subr.mxu0 0.0
    %1087 = vmatpush1.msra.mxu0 0.0
    %1088 = vmatprep.subr.mxu0 0.0
    %1089 = vmatpush1.msra.mxu0 0.0
    %1090 = vmatprep.subr.mxu0 0.0
    %1091 = vmatpush1.msra.mxu0 0.0
    %1092 = vmatprep.subr.mxu0 0.0
    %1093 = vmatpush1.msra.mxu0 0.0
    %1094 = vmatprep.subr.mxu0 0.0
    %1095 = vmatpush1.msra.mxu0 0.0
    %1096 = vmatprep.subr.mxu0 0.0
    %1097 = vmatpush1.msra.mxu0 0.0
    %1098 = vmatprep.subr.mxu0 0.0
    %1099 = vmatpush1.msra.mxu0 0.0
    %1100 = vmatprep.subr.mxu0 0.0
    %1101 = vmatpush1.msra.mxu0 0.0
    %1102 = vmatprep.mubr.f32.mxu0 0.0
    %1103 = vmatmul.mubr.f32.gmra.mrb[0].mxu0 %v1033
    %v1104 = vpop.f32.mrb[0].mxu0
    %v1105 = vadd.f32 %v1030, %v1104
    %v1106 = vpop.f32.mrb[0].mxu0
    %1107 = vmatprep.mubr.f32.mxu0 0.0
    %1108 = vmatmul.mubr.f32.gmra.mrb[0].mxu0 %v1036
    %v1109 = vpop.f32.mrb[0].mxu0
    %v1110 = vadd.f32 %v1030, %v1109
    %v1111 = vpop.f32.mrb[0].mxu0
    %1112 = vdwg.mxu0
    %1115 = vrot.lane.b32.xlu0 %v733, 96
    %v1116 = vpop.permute.xlu0 %1115
    %1117 = vrot.lane.b32.xlu0 %v739, 96
    %v1118 = vpop.permute.xlu0 %1117
    %v1121 = vadd.f32 %v1105, %v1116
    %v1122 = vadd.f32 %v1110, %v1118
    %v1123 = vmul.f32 %v1121, 0.5
    %v1124 = vmul.f32 %v1122, 0.5
    %v1125 = vtanh.pop %v1123
    %v1126 = vtanh.pop %v1124
    %v1127 = vadd.f32 %v1125, 1.0
    %v1128 = vadd.f32 %v1126, 1.0
    %v1129 = vmul.f32 %v1127, 0.5
    %v1130 = vmul.f32 %v1128, 0.5
    %1131 = vrot.lane.b32.xlu0 %v733, 32
    %v1132 = vpop.permute.xlu0 %1131
    %1133 = vrot.lane.b32.xlu0 %v739, 32
    %v1134 = vpop.permute.xlu0 %1133
    %v1137 = vmul.f32 %v1129, %v1132
    %v1138 = vmul.f32 %v1130, %v1134
    %1141 = vrot.lane.b32.xlu0 %v1137, 64
    %v1142 = vpop.permute.xlu0 %1141
    %1143 = vrot.lane.b32.xlu0 %v1138, 64
    %v1144 = vpop.permute.xlu0 %1143
    %v1147 = vadd.f32 %v1105, %v1142
    %v1148 = vadd.f32 %v1110, %v1144
    %v1149 = vtanh.pop %v1147
    %v1150 = vtanh.pop %v1148
    %v1151 = vsub.f32 1.0, %v1129
    %v1152 = vsub.f32 1.0, %v1130
    %1155 = vrot.lane.b32.xlu0 %v1149, 96
    %v1156 = vpop.permute.xlu0 %1155
    %1157 = vrot.lane.b32.xlu0 %v1150, 96
    %v1158 = vpop.permute.xlu0 %1157
    %v1161 = vmul.f32 %v1151, %v1156
    %v1162 = vmul.f32 %v1152, %v1158
    %1165 = vrot.lane.b32.xlu0 %v810, 32
    %v1166 = vpop.permute.xlu0 %1165
    %1167 = vrot.lane.b32.xlu0 %v815, 32
    %v1168 = vpop.permute.xlu0 %1167
    %v1171 = vmul.f32 %v1129, %v1166
    %v1172 = vmul.f32 %v1130, %v1168
    %v1173 = vadd.f32 %v1161, %v1171
    %v1174 = vadd.f32 %v1162, %v1172
    %1177 = vrot.lane.b32.xlu0 %v1173, 96
    %v1178 = vpop.permute.xlu0 %1177
    %1179 = vrot.lane.b32.xlu0 %v1174, 96
    %v1180 = vpop.permute.xlu0 %1179
    %1183 = vmatprep.subr.mxu0 0.0
    %1184 = vmatpush1.msra.mxu0 %v1178
    %1185 = vmatprep.subr.mxu0 0.0
    %1186 = vmatpush1.msra.mxu0 %v1180
    %1187 = vmatprep.subr.mxu0 0.0
    %1188 = vmatpush1.msra.mxu0 0.0
    %1189 = vmatprep.subr.mxu0 0.0
    %1190 = vmatpush1.msra.mxu0 0.0
    %1191 = vmatprep.subr.mxu0 0.0
    %1192 = vmatpush1.msra.mxu0 0.0
    %1193 = vmatprep.subr.mxu0 0.0
    %1194 = vmatpush1.msra.mxu0 0.0
    %1195 = vmatprep.subr.mxu0 0.0
    %1196 = vmatpush1.msra.mxu0 0.0
    %1197 = vmatprep.subr.mxu0 0.0
    %1198 = vmatpush1.msra.mxu0 0.0
    %1199 = vmatprep.subr.mxu0 0.0
    %1200 = vmatpush1.msra.mxu0 0.0
    %1201 = vmatprep.subr.mxu0 0.0
    %1202 = vmatpush1.msra.mxu0 0.0
    %1203 = vmatprep.subr.mxu0 0.0
    %1204 = vmatpush1.msra.mxu0 0.0
    %1205 = vmatprep.subr.mxu0 0.0
    %1206 = vmatpush1.msra.mxu0 0.0
    %1207 = vmatprep.subr.mxu0 0.0
    %1208 = vmatpush1.msra.mxu0 0.0
    %1209 = vmatprep.subr.mxu0 0.0
    %1210 = vmatpush1.msra.mxu0 0.0
    %1211 = vmatprep.subr.mxu0 0.0
    %1212 = vmatpush1.msra.mxu0 0.0
    %1213 = vmatprep.subr.mxu0 0.0
    %1214 = vmatpush1.msra.mxu0 0.0
    %1215 = vmatprep.subr.mxu0 0.0
    %1216 = vmatpush1.msra.mxu0 0.0
    %1217 = vmatprep.subr.mxu0 0.0
    %1218 = vmatpush1.msra.mxu0 0.0
    %1219 = vmatprep.subr.mxu0 0.0
    %1220 = vmatpush1.msra.mxu0 0.0
    %1221 = vmatprep.subr.mxu0 0.0
    %1222 = vmatpush1.msra.mxu0 0.0
    %1223 = vmatprep.subr.mxu0 0.0
    %1224 = vmatpush1.msra.mxu0 0.0
    %1225 = vmatprep.subr.mxu0 0.0
    %1226 = vmatpush1.msra.mxu0 0.0
    %1227 = vmatprep.subr.mxu0 0.0
    %1228 = vmatpush1.msra.mxu0 0.0
    %1229 = vmatprep.subr.mxu0 0.0
    %1230 = vmatpush1.msra.mxu0 0.0
    %1231 = vmatprep.subr.mxu0 0.0
    %1232 = vmatpush1.msra.mxu0 0.0
    %1233 = vmatprep.subr.mxu0 0.0
    %1234 = vmatpush1.msra.mxu0 0.0
    %1235 = vmatprep.subr.mxu0 0.0
    %1236 = vmatpush1.msra.mxu0 0.0
    %1237 = vmatprep.subr.mxu0 0.0
    %1238 = vmatpush1.msra.mxu0 0.0
    %1239 = vmatprep.subr.mxu0 0.0
    %1240 = vmatpush1.msra.mxu0 0.0
    %1241 = vmatprep.subr.mxu0 0.0
    %1242 = vmatpush1.msra.mxu0 0.0
    %1243 = vmatprep.subr.mxu0 0.0
    %1244 = vmatpush1.msra.mxu0 0.0
    %1245 = vmatprep.subr.mxu0 0.0
    %1246 = vmatpush1.msra.mxu0 0.0
    %1247 = vmatprep.mubr.f32.mxu0 0.0
    %1248 = vmatmul.mubr.f32.gmra.mrb[0].mxu0 %v851
    %v1249 = vpop.f32.mrb[0].mxu0
    %v1250 = vadd.f32 0.0, %v1249
    %v1251 = vpop.f32.mrb[0].mxu0
    %1252 = vdwg.mxu0
    %s1253 = scalar_lea.vmem %s10, 32
    %v1254 = vld [vmem:[%s1253] sm:$0xff]
    %v1255 = vld [vmem:[%s1253 + $0x8] sm:$0xff]
    %v1256 = vld [vmem:[%s1253 + $0x10] sm:$0xff]
    %v1257 = vld [vmem:[%s1253 + $0x18] sm:$0xff]
    %s1258 = scalar_lea.vmem %s11, 1
    %v1259 = vld [vmem:[%s1258] sm:$0x1]
    %s1260 = scalar_lea.vmem %s12, 64
    %v1261 = vld [vmem:[%s1260] sm:$0xff]
    %v1262 = vld [vmem:[%s1260 + $0x8] sm:$0xff]
    %v1263 = vld [vmem:[%s1260 + $0x10] sm:$0xff]
    %v1264 = vld [vmem:[%s1260 + $0x18] sm:$0xff]
    %v1265 = vld [vmem:[%s1260 + $0x20] sm:$0xff]
    %v1266 = vld [vmem:[%s1260 + $0x28] sm:$0xff]
    %v1267 = vld [vmem:[%s1260 + $0x30] sm:$0xff]
    %v1268 = vld [vmem:[%s1260 + $0x38] sm:$0xff]
    %s1269 = scalar_lea.vmem %s13, 2
    %v1270 = vld [vmem:[%s1269] sm:$0x3]
    %s1271 = scalar_lea.vmem [#allocation11], 32
    %v1272 = vld [vmem:[%s1271] sm:$0xff]
    %v1273 = vld [vmem:[%s1271 + $0x8] sm:$0xff]
    %v1274 = vld [vmem:[%s1271 + $0x10] sm:$0xff]
    %v1275 = vld [vmem:[%s1271 + $0x18] sm:$0xff]
    %s1276 = scalar_lea.vmem %s15, 1
    %v1277 = vld [vmem:[%s1276] sm:$0x1]
    %v1279 = vsel %vm493, %v1250, 0
    %1281 = vmatprep.subr.mxu0 0.0
    %1282 = vmatpush1.msra.mxu0 %v1254
    %1283 = vmatprep.subr.mxu0 0.0
    %1284 = vmatpush1.msra.mxu0 %v1255
    %1285 = vmatprep.subr.mxu0 0.0
    %1286 = vmatpush1.msra.mxu0 %v1256
    %1287 = vmatprep.subr.mxu0 0.0
    %1288 = vmatpush1.msra.mxu0 %v1257
    %1289 = vmatprep.subr.mxu0 0.0
    %1290 = vmatpush1.msra.mxu0 0.0
    %1291 = vmatprep.subr.mxu0 0.0
    %1292 = vmatpush1.msra.mxu0 0.0
    %1293 = vmatprep.subr.mxu0 0.0
    %1294 = vmatpush1.msra.mxu0 0.0
    %1295 = vmatprep.subr.mxu0 0.0
    %1296 = vmatpush1.msra.mxu0 0.0
    %1297 = vmatprep.subr.mxu0 0.0
    %1298 = vmatpush1.msra.mxu0 0.0
    %1299 = vmatprep.subr.mxu0 0.0
    %1300 = vmatpush1.msra.mxu0 0.0
    %1301 = vmatprep.subr.mxu0 0.0
    %1302 = vmatpush1.msra.mxu0 0.0
    %1303 = vmatprep.subr.mxu0 0.0
    %1304 = vmatpush1.msra.mxu0 0.0
    %1305 = vmatprep.subr.mxu0 0.0
    %1306 = vmatpush1.msra.mxu0 0.0
    %1307 = vmatprep.subr.mxu0 0.0
    %1308 = vmatpush1.msra.mxu0 0.0
    %1309 = vmatprep.subr.mxu0 0.0
    %1310 = vmatpush1.msra.mxu0 0.0
    %1311 = vmatprep.subr.mxu0 0.0
    %1312 = vmatpush1.msra.mxu0 0.0
    %1313 = vmatprep.subr.mxu0 0.0
    %1314 = vmatpush1.msra.mxu0 0.0
    %1315 = vmatprep.subr.mxu0 0.0
    %1316 = vmatpush1.msra.mxu0 0.0
    %1317 = vmatprep.subr.mxu0 0.0
    %1318 = vmatpush1.msra.mxu0 0.0
    %1319 = vmatprep.subr.mxu0 0.0
    %1320 = vmatpush1.msra.mxu0 0.0
    %1321 = vmatprep.subr.mxu0 0.0
    %1322 = vmatpush1.msra.mxu0 0.0
    %1323 = vmatprep.subr.mxu0 0.0
    %1324 = vmatpush1.msra.mxu0 0.0
    %1325 = vmatprep.subr.mxu0 0.0
    %1326 = vmatpush1.msra.mxu0 0.0
    %1327 = vmatprep.subr.mxu0 0.0
    %1328 = vmatpush1.msra.mxu0 0.0
    %1329 = vmatprep.subr.mxu0 0.0
    %1330 = vmatpush1.msra.mxu0 0.0
    %1331 = vmatprep.subr.mxu0 0.0
    %1332 = vmatpush1.msra.mxu0 0.0
    %1333 = vmatprep.subr.mxu0 0.0
    %1334 = vmatpush1.msra.mxu0 0.0
    %1335 = vmatprep.subr.mxu0 0.0
    %1336 = vmatpush1.msra.mxu0 0.0
    %1337 = vmatprep.subr.mxu0 0.0
    %1338 = vmatpush1.msra.mxu0 0.0
    %1339 = vmatprep.subr.mxu0 0.0
    %1340 = vmatpush1.msra.mxu0 0.0
    %1341 = vmatprep.subr.mxu0 0.0
    %1342 = vmatpush1.msra.mxu0 0.0
    %1343 = vmatprep.subr.mxu0 0.0
    %1344 = vmatpush1.msra.mxu0 0.0
    %1345 = vmatprep.mubr.f32.mxu0 0.0
    %1346 = vmatmul.mubr.f32.gmra.mrb[0].mxu0 %v1279
    %v1347 = vpop.f32.mrb[0].mxu0
    %v1348 = vadd.f32 0.0, %v1347
    %v1349 = vpop.f32.mrb[0].mxu0
    %1350 = vdwg.mxu0
    %1351 = vmatprep.subr.mxu0 0.0
    %1352 = vmatpush1.msra.mxu0 %v1348
    %1353 = vmatprep.subr.mxu0 0.0
    %1354 = vmatpush1.msra.mxu0 0.0
    %1355 = vmatprep.subr.mxu0 0.0
    %1356 = vmatpush1.msra.mxu0 0.0
    %1357 = vmatprep.subr.mxu0 0.0
    %1358 = vmatpush1.msra.mxu0 0.0
    %1359 = vmatprep.subr.mxu0 0.0
    %1360 = vmatpush1.msra.mxu0 0.0
    %1361 = vmatprep.subr.mxu0 0.0
    %1362 = vmatpush1.msra.mxu0 0.0
    %1363 = vmatprep.subr.mxu0 0.0
    %1364 = vmatpush1.msra.mxu0 0.0
    %1365 = vmatprep.subr.mxu0 0.0
    %1366 = vmatpush1.msra.mxu0 0.0
    %1367 = vmatprep.subr.mxu0 0.0
    %1368 = vmatpush1.msra.mxu0 0.0
    %1369 = vmatprep.subr.mxu0 0.0
    %1370 = vmatpush1.msra.mxu0 0.0
    %1371 = vmatprep.subr.mxu0 0.0
    %1372 = vmatpush1.msra.mxu0 0.0
    %1373 = vmatprep.subr.mxu0 0.0
    %1374 = vmatpush1.msra.mxu0 0.0
    %1375 = vmatprep.subr.mxu0 0.0
    %1376 = vmatpush1.msra.mxu0 0.0
    %1377 = vmatprep.subr.mxu0 0.0
    %1378 = vmatpush1.msra.mxu0 0.0
    %1379 = vmatprep.subr.mxu0 0.0
    %1380 = vmatpush1.msra.mxu0 0.0
    %1381 = vmatprep.subr.mxu0 0.0
    %1382 = vmatpush1.msra.mxu0 0.0
    %1383 = vmatprep.subr.mxu0 0.0
    %1384 = vmatpush1.msra.mxu0 0.0
    %1385 = vmatprep.subr.mxu0 0.0
    %1386 = vmatpush1.msra.mxu0 0.0
    %1387 = vmatprep.subr.mxu0 0.0
    %1388 = vmatpush1.msra.mxu0 0.0
    %1389 = vmatprep.subr.mxu0 0.0
    %1390 = vmatpush1.msra.mxu0 0.0
    %1391 = vmatprep.subr.mxu0 0.0
    %1392 = vmatpush1.msra.mxu0 0.0
    %1393 = vmatprep.subr.mxu0 0.0
    %1394 = vmatpush1.msra.mxu0 0.0
    %1395 = vmatprep.subr.mxu0 0.0
    %1396 = vmatpush1.msra.mxu0 0.0
    %1397 = vmatprep.subr.mxu0 0.0
    %1398 = vmatpush1.msra.mxu0 0.0
    %1399 = vmatprep.subr.mxu0 0.0
    %1400 = vmatpush1.msra.mxu0 0.0
    %1401 = vmatprep.subr.mxu0 0.0
    %1402 = vmatpush1.msra.mxu0 0.0
    %1403 = vmatprep.subr.mxu0 0.0
    %1404 = vmatpush1.msra.mxu0 0.0
    %1405 = vmatprep.subr.mxu0 0.0
    %1406 = vmatpush1.msra.mxu0 0.0
    %1407 = vmatprep.subr.mxu0 0.0
    %1408 = vmatpush1.msra.mxu0 0.0
    %1409 = vmatprep.subr.mxu0 0.0
    %1410 = vmatpush1.msra.mxu0 0.0
    %1411 = vmatprep.subr.mxu0 0.0
    %1412 = vmatpush1.msra.mxu0 0.0
    %1413 = vmatprep.subr.mxu0 0.0
    %1414 = vmatpush1.msra.mxu0 0.0
    %1415 = vmatprep.mubr.f32.mxu0 0.0
    %1416 = vmatmul.mubr.f32.gmra.mrb[0].mxu0 %v407
    %v1417 = vpop.f32.mrb[0].mxu0
    %v1418 = vadd.f32 0.0, %v1417
    %v1419 = vpop.f32.mrb[0].mxu0
    %1420 = vmatprep.mubr.f32.mxu0 0.0
    %1421 = vmatmul.mubr.f32.gmra.mrb[0].mxu0 %v410
    %v1422 = vpop.f32.mrb[0].mxu0
    %v1423 = vadd.f32 0.0, %v1422
    %v1424 = vpop.f32.mrb[0].mxu0
    %1425 = vdwg.mxu0
    %v1427 = vlaneseq
    %v1428 = vshrl.u32 %v1427, 7
    %v1429 = vsub.s32 0, %v1428
    %v1430 = vrot.slane %v1270, %v1429
    %v1431 = vlaneseq
    %v1432 = vshrl.u32 %v1431, 7
    %v1433 = vsub.s32 1, %v1432
    %v1434 = vrot.slane %v1270, %v1433
    %1437 = vmatprep.subr.mxu0 %v1262
    %1438 = vmatpush1.msra.mxu0 %v1261
    %1439 = vmatprep.subr.mxu0 %v1264
    %1440 = vmatpush1.msra.mxu0 %v1263
    %1441 = vmatprep.subr.mxu0 %v1266
    %1442 = vmatpush1.msra.mxu0 %v1265
    %1443 = vmatprep.subr.mxu0 %v1268
    %1444 = vmatpush1.msra.mxu0 %v1267
    %1445 = vmatprep.subr.mxu0 0.0
    %1446 = vmatpush1.msra.mxu0 0.0
    %1447 = vmatprep.subr.mxu0 0.0
    %1448 = vmatpush1.msra.mxu0 0.0
    %1449 = vmatprep.subr.mxu0 0.0
    %1450 = vmatpush1.msra.mxu0 0.0
    %1451 = vmatprep.subr.mxu0 0.0
    %1452 = vmatpush1.msra.mxu0 0.0
    %1453 = vmatprep.subr.mxu0 0.0
    %1454 = vmatpush1.msra.mxu0 0.0
    %1455 = vmatprep.subr.mxu0 0.0
    %1456 = vmatpush1.msra.mxu0 0.0
    %1457 = vmatprep.subr.mxu0 0.0
    %1458 = vmatpush1.msra.mxu0 0.0
    %1459 = vmatprep.subr.mxu0 0.0
    %1460 = vmatpush1.msra.mxu0 0.0
    %1461 = vmatprep.subr.mxu0 0.0
    %1462 = vmatpush1.msra.mxu0 0.0
    %1463 = vmatprep.subr.mxu0 0.0
    %1464 = vmatpush1.msra.mxu0 0.0
    %1465 = vmatprep.subr.mxu0 0.0
    %1466 = vmatpush1.msra.mxu0 0.0
    %1467 = vmatprep.subr.mxu0 0.0
    %1468 = vmatpush1.msra.mxu0 0.0
    %1469 = vmatprep.subr.mxu0 0.0
    %1470 = vmatpush1.msra.mxu0 0.0
    %1471 = vmatprep.subr.mxu0 0.0
    %1472 = vmatpush1.msra.mxu0 0.0
    %1473 = vmatprep.subr.mxu0 0.0
    %1474 = vmatpush1.msra.mxu0 0.0
    %1475 = vmatprep.subr.mxu0 0.0
    %1476 = vmatpush1.msra.mxu0 0.0
    %1477 = vmatprep.subr.mxu0 0.0
    %1478 = vmatpush1.msra.mxu0 0.0
    %1479 = vmatprep.subr.mxu0 0.0
    %1480 = vmatpush1.msra.mxu0 0.0
    %1481 = vmatprep.subr.mxu0 0.0
    %1482 = vmatpush1.msra.mxu0 0.0
    %1483 = vmatprep.subr.mxu0 0.0
    %1484 = vmatpush1.msra.mxu0 0.0
    %1485 = vmatprep.subr.mxu0 0.0
    %1486 = vmatpush1.msra.mxu0 0.0
    %1487 = vmatprep.subr.mxu0 0.0
    %1488 = vmatpush1.msra.mxu0 0.0
    %1489 = vmatprep.subr.mxu0 0.0
    %1490 = vmatpush1.msra.mxu0 0.0
    %1491 = vmatprep.subr.mxu0 0.0
    %1492 = vmatpush1.msra.mxu0 0.0
    %1493 = vmatprep.subr.mxu0 0.0
    %1494 = vmatpush1.msra.mxu0 0.0
    %1495 = vmatprep.subr.mxu0 0.0
    %1496 = vmatpush1.msra.mxu0 0.0
    %1497 = vmatprep.subr.mxu0 0.0
    %1498 = vmatpush1.msra.mxu0 0.0
    %1499 = vmatprep.subr.mxu0 0.0
    %1500 = vmatpush1.msra.mxu0 0.0
    %1501 = vmatprep.mubr.f32.mxu0 0.0
    %1502 = vmatmul.mubr.f32.gmra.mrb[0].mxu0 %v1279
    %v1503 = vpop.f32.mrb[0].mxu0
    %v1504 = vadd.f32 %v1430, %v1503
    %v1505 = vpop.f32.mrb[0].mxu0
    %v1506 = vadd.f32 %v1434, %v1505
    %1507 = vdwg.mxu0
    %1508 = vmatprep.subr.mxu0 %v1506
    %1509 = vmatpush1.msra.mxu0 %v1504
    %1510 = vmatprep.subr.mxu0 0.0
    %1511 = vmatpush1.msra.mxu0 0.0
    %1512 = vmatprep.subr.mxu0 0.0
    %1513 = vmatpush1.msra.mxu0 0.0
    %1514 = vmatprep.subr.mxu0 0.0
    %1515 = vmatpush1.msra.mxu0 0.0
    %1516 = vmatprep.subr.mxu0 0.0
    %1517 = vmatpush1.msra.mxu0 0.0
    %1518 = vmatprep.subr.mxu0 0.0
    %1519 = vmatpush1.msra.mxu0 0.0
    %1520 = vmatprep.subr.mxu0 0.0
    %1521 = vmatpush1.msra.mxu0 0.0
    %1522 = vmatprep.subr.mxu0 0.0
    %1523 = vmatpush1.msra.mxu0 0.0
    %1524 = vmatprep.subr.mxu0 0.0
    %1525 = vmatpush1.msra.mxu0 0.0
    %1526 = vmatprep.subr.mxu0 0.0
    %1527 = vmatpush1.msra.mxu0 0.0
    %1528 = vmatprep.subr.mxu0 0.0
    %1529 = vmatpush1.msra.mxu0 0.0
    %1530 = vmatprep.subr.mxu0 0.0
    %1531 = vmatpush1.msra.mxu0 0.0
    %1532 = vmatprep.subr.mxu0 0.0
    %1533 = vmatpush1.msra.mxu0 0.0
    %1534 = vmatprep.subr.mxu0 0.0
    %1535 = vmatpush1.msra.mxu0 0.0
    %1536 = vmatprep.subr.mxu0 0.0
    %1537 = vmatpush1.msra.mxu0 0.0
    %1538 = vmatprep.subr.mxu0 0.0
    %1539 = vmatpush1.msra.mxu0 0.0
    %1540 = vmatprep.subr.mxu0 0.0
    %1541 = vmatpush1.msra.mxu0 0.0
    %1542 = vmatprep.subr.mxu0 0.0
    %1543 = vmatpush1.msra.mxu0 0.0
    %1544 = vmatprep.subr.mxu0 0.0
    %1545 = vmatpush1.msra.mxu0 0.0
    %1546 = vmatprep.subr.mxu0 0.0
    %1547 = vmatpush1.msra.mxu0 0.0
    %1548 = vmatprep.subr.mxu0 0.0
    %1549 = vmatpush1.msra.mxu0 0.0
    %1550 = vmatprep.subr.mxu0 0.0
    %1551 = vmatpush1.msra.mxu0 0.0
    %1552 = vmatprep.subr.mxu0 0.0
    %1553 = vmatpush1.msra.mxu0 0.0
    %1554 = vmatprep.subr.mxu0 0.0
    %1555 = vmatpush1.msra.mxu0 0.0
    %1556 = vmatprep.subr.mxu0 0.0
    %1557 = vmatpush1.msra.mxu0 0.0
    %1558 = vmatprep.subr.mxu0 0.0
    %1559 = vmatpush1.msra.mxu0 0.0
    %1560 = vmatprep.subr.mxu0 0.0
    %1561 = vmatpush1.msra.mxu0 0.0
    %1562 = vmatprep.subr.mxu0 0.0
    %1563 = vmatpush1.msra.mxu0 0.0
    %1564 = vmatprep.subr.mxu0 0.0
    %1565 = vmatpush1.msra.mxu0 0.0
    %1566 = vmatprep.subr.mxu0 0.0
    %1567 = vmatpush1.msra.mxu0 0.0
    %1568 = vmatprep.subr.mxu0 0.0
    %1569 = vmatpush1.msra.mxu0 0.0
    %1570 = vmatprep.subr.mxu0 0.0
    %1571 = vmatpush1.msra.mxu0 0.0
    %1572 = vmatprep.mubr.f32.mxu0 0.0
    %1573 = vmatmul.mubr.f32.gmra.mrb[0].mxu0 %v661
    %v1574 = vpop.f32.mrb[0].mxu0
    %v1575 = vadd.f32 0.0, %v1574
    %v1576 = vpop.f32.mrb[0].mxu0
    %v1577 = vadd.f32 0.0, %v1576
    %1578 = vmatprep.mubr.f32.mxu0 0.0
    %1579 = vmatmul.mubr.f32.gmra.mrb[0].mxu0 %v664
    %v1580 = vpop.f32.mrb[0].mxu0
    %v1581 = vadd.f32 0.0, %v1580
    %v1582 = vpop.f32.mrb[0].mxu0
    %v1583 = vadd.f32 0.0, %v1582
    %1584 = vdwg.mxu0
    %1585 = vmatprep.subr.mxu0 0.0
    %1586 = vmatpush1.msra.mxu0 %v1250
    %1587 = vmatprep.subr.mxu0 0.0
    %1588 = vmatpush1.msra.mxu0 0.0
    %1589 = vmatprep.subr.mxu0 0.0
    %1590 = vmatpush1.msra.mxu0 0.0
    %1591 = vmatprep.subr.mxu0 0.0
    %1592 = vmatpush1.msra.mxu0 0.0
    %1593 = vmatprep.subr.mxu0 0.0
    %1594 = vmatpush1.msra.mxu0 0.0
    %1595 = vmatprep.subr.mxu0 0.0
    %1596 = vmatpush1.msra.mxu0 0.0
    %1597 = vmatprep.subr.mxu0 0.0
    %1598 = vmatpush1.msra.mxu0 0.0
    %1599 = vmatprep.subr.mxu0 0.0
    %1600 = vmatpush1.msra.mxu0 0.0
    %1601 = vmatprep.subr.mxu0 0.0
    %1602 = vmatpush1.msra.mxu0 0.0
    %1603 = vmatprep.subr.mxu0 0.0
    %1604 = vmatpush1.msra.mxu0 0.0
    %1605 = vmatprep.subr.mxu0 0.0
    %1606 = vmatpush1.msra.mxu0 0.0
    %1607 = vmatprep.subr.mxu0 0.0
    %1608 = vmatpush1.msra.mxu0 0.0
    %1609 = vmatprep.subr.mxu0 0.0
    %1610 = vmatpush1.msra.mxu0 0.0
    %1611 = vmatprep.subr.mxu0 0.0
    %1612 = vmatpush1.msra.mxu0 0.0
    %1613 = vmatprep.subr.mxu0 0.0
    %1614 = vmatpush1.msra.mxu0 0.0
    %1615 = vmatprep.subr.mxu0 0.0
    %1616 = vmatpush1.msra.mxu0 0.0
    %1617 = vmatprep.subr.mxu0 0.0
    %1618 = vmatpush1.msra.mxu0 0.0
    %1619 = vmatprep.subr.mxu0 0.0
    %1620 = vmatpush1.msra.mxu0 0.0
    %1621 = vmatprep.subr.mxu0 0.0
    %1622 = vmatpush1.msra.mxu0 0.0
    %1623 = vmatprep.subr.mxu0 0.0
    %1624 = vmatpush1.msra.mxu0 0.0
    %1625 = vmatprep.subr.mxu0 0.0
    %1626 = vmatpush1.msra.mxu0 0.0
    %1627 = vmatprep.subr.mxu0 0.0
    %1628 = vmatpush1.msra.mxu0 0.0
    %1629 = vmatprep.subr.mxu0 0.0
    %1630 = vmatpush1.msra.mxu0 0.0
    %1631 = vmatprep.subr.mxu0 0.0
    %1632 = vmatpush1.msra.mxu0 0.0
    %1633 = vmatprep.subr.mxu0 0.0
    %1634 = vmatpush1.msra.mxu0 0.0
    %1635 = vmatprep.subr.mxu0 0.0
    %1636 = vmatpush1.msra.mxu0 0.0
    %1637 = vmatprep.subr.mxu0 0.0
    %1638 = vmatpush1.msra.mxu0 0.0
    %1639 = vmatprep.subr.mxu0 0.0
    %1640 = vmatpush1.msra.mxu0 0.0
    %1641 = vmatprep.subr.mxu0 0.0
    %1642 = vmatpush1.msra.mxu0 0.0
    %1643 = vmatprep.subr.mxu0 0.0
    %1644 = vmatpush1.msra.mxu0 0.0
    %1645 = vmatprep.subr.mxu0 0.0
    %1646 = vmatpush1.msra.mxu0 0.0
    %1647 = vmatprep.subr.mxu0 0.0
    %1648 = vmatpush1.msra.mxu0 0.0
    %1649 = vmatprep.mubr.f32.mxu0 0.0
    %1650 = vmatmul.mubr.f32.gmra.mrb[0].mxu0 %v661
    %v1651 = vpop.f32.mrb[0].mxu0
    %v1652 = vadd.f32 0.0, %v1651
    %v1653 = vpop.f32.mrb[0].mxu0
    %1654 = vmatprep.mubr.f32.mxu0 0.0
    %1655 = vmatmul.mubr.f32.gmra.mrb[0].mxu0 %v664
    %v1656 = vpop.f32.mrb[0].mxu0
    %v1657 = vadd.f32 0.0, %v1656
    %v1658 = vpop.f32.mrb[0].mxu0
    %1659 = vdwg.mxu0
    %v1660 = vadd.f32 %v1577, %v1418
    %v1661 = vadd.f32 %v1583, %v1423
    %v1663 = vlaneseq
    %v1664 = vshrl.u32 %v1663, 7
    %v1665 = vsub.s32 0, %v1664
    %v1666 = vrot.slane %v1259, %v1665
    %v1668 = vadd.f32 %v1660, %v1666
    %v1669 = vadd.f32 %v1661, %v1666
    %vm1670 = vcmp.gt.f32.partialorder %v1668, 0.0
    %vm1671 = vcmp.gt.f32.partialorder %v1669, 0.0
    %v1672 = vmul.f32 %v1668, 0.01
    %v1673 = vmul.f32 %v1669, 0.01
    %v1674 = vsel %vm1670, %v1668, %v1672
    %v1675 = vsel %vm1671, %v1669, %v1673
    %v1676 = vsel %vm834, %v1674, -inf
    %v1677 = vsel %vm834, %v1675, -inf
    %v1678 = vmax.f32 %v1676, %v1677
    %v1679 = vrot.slane %v1678, 4
    %v1680 = vmax.f32 %v1678, %v1679
    %v1681 = vrot.slane %v1680, 2
    %v1682 = vmax.f32 %v1680, %v1681
    %v1683 = vrot.slane %v1682, 1
    %v1684 = vmax.f32 %v1682, %v1683
    %v1685 = vsub.f32 %v1674, %v1684
    %v1686 = vsub.f32 %v1675, %v1684
    %v1687 = vmul.f32 %v1685, 1.442695
    %v1688 = vpow.pop %v1687
    %v1689 = vmul.f32 %v1686, 1.442695
    %v1690 = vpow.pop %v1689
    %1691 = vmatprep.subr.mxu0 0.0
    %1692 = vmatpush1.msra.mxu0 %v1688
    %1693 = vmatprep.subr.mxu0 0.0
    %1694 = vmatpush1.msra.mxu0 %v1690
    %1695 = vmatprep.subr.mxu0 0.0
    %1696 = vmatpush1.msra.mxu0 0.0
    %1697 = vmatprep.subr.mxu0 0.0
    %1698 = vmatpush1.msra.mxu0 0.0
    %1699 = vmatprep.subr.mxu0 0.0
    %1700 = vmatpush1.msra.mxu0 0.0
    %1701 = vmatprep.subr.mxu0 0.0
    %1702 = vmatpush1.msra.mxu0 0.0
    %1703 = vmatprep.subr.mxu0 0.0
    %1704 = vmatpush1.msra.mxu0 0.0
    %1705 = vmatprep.subr.mxu0 0.0
    %1706 = vmatpush1.msra.mxu0 0.0
    %1707 = vmatprep.subr.mxu0 0.0
    %1708 = vmatpush1.msra.mxu0 0.0
    %1709 = vmatprep.subr.mxu0 0.0
    %1710 = vmatpush1.msra.mxu0 0.0
    %1711 = vmatprep.subr.mxu0 0.0
    %1712 = vmatpush1.msra.mxu0 0.0
    %1713 = vmatprep.subr.mxu0 0.0
    %1714 = vmatpush1.msra.mxu0 0.0
    %1715 = vmatprep.subr.mxu0 0.0
    %1716 = vmatpush1.msra.mxu0 0.0
    %1717 = vmatprep.subr.mxu0 0.0
    %1718 = vmatpush1.msra.mxu0 0.0
    %1719 = vmatprep.subr.mxu0 0.0
    %1720 = vmatpush1.msra.mxu0 0.0
    %1721 = vmatprep.subr.mxu0 0.0
    %1722 = vmatpush1.msra.mxu0 0.0
    %1723 = vmatprep.subr.mxu0 0.0
    %1724 = vmatpush1.msra.mxu0 0.0
    %1725 = vmatprep.subr.mxu0 0.0
    %1726 = vmatpush1.msra.mxu0 0.0
    %1727 = vmatprep.subr.mxu0 0.0
    %1728 = vmatpush1.msra.mxu0 0.0
    %1729 = vmatprep.subr.mxu0 0.0
    %1730 = vmatpush1.msra.mxu0 0.0
    %1731 = vmatprep.subr.mxu0 0.0
    %1732 = vmatpush1.msra.mxu0 0.0
    %1733 = vmatprep.subr.mxu0 0.0
    %1734 = vmatpush1.msra.mxu0 0.0
    %1735 = vmatprep.subr.mxu0 0.0
    %1736 = vmatpush1.msra.mxu0 0.0
    %1737 = vmatprep.subr.mxu0 0.0
    %1738 = vmatpush1.msra.mxu0 0.0
    %1739 = vmatprep.subr.mxu0 0.0
    %1740 = vmatpush1.msra.mxu0 0.0
    %1741 = vmatprep.subr.mxu0 0.0
    %1742 = vmatpush1.msra.mxu0 0.0
    %1743 = vmatprep.subr.mxu0 0.0
    %1744 = vmatpush1.msra.mxu0 0.0
    %1745 = vmatprep.subr.mxu0 0.0
    %1746 = vmatpush1.msra.mxu0 0.0
    %1747 = vmatprep.subr.mxu0 0.0
    %1748 = vmatpush1.msra.mxu0 0.0
    %1749 = vmatprep.subr.mxu0 0.0
    %1750 = vmatpush1.msra.mxu0 0.0
    %1751 = vmatprep.subr.mxu0 0.0
    %1752 = vmatpush1.msra.mxu0 0.0
    %1753 = vmatprep.subr.mxu0 0.0
    %1754 = vmatpush1.msra.mxu0 0.0
    %1755 = vmatprep.mubr.f32.mxu0 0.0
    %1756 = vmatmul.mubr.f32.gmra.mrb[0].mxu0 %v851
    %v1757 = vpop.f32.mrb[0].mxu0
    %v1758 = vadd.f32 0.0, %v1757
    %v1759 = vpop.f32.mrb[0].mxu0
    %1760 = vdwg.mxu0
    %1761 = vmatprep.subr.mxu0 0.0
    %1762 = vmatpush1.msra.mxu0 %v1758
    %1763 = vmatprep.subr.mxu0 0.0
    %1764 = vmatpush1.msra.mxu0 0.0
    %1765 = vmatprep.subr.mxu0 0.0
    %1766 = vmatpush1.msra.mxu0 0.0
    %1767 = vmatprep.subr.mxu0 0.0
    %1768 = vmatpush1.msra.mxu0 0.0
    %1769 = vmatprep.subr.mxu0 0.0
    %1770 = vmatpush1.msra.mxu0 0.0
    %1771 = vmatprep.subr.mxu0 0.0
    %1772 = vmatpush1.msra.mxu0 0.0
    %1773 = vmatprep.subr.mxu0 0.0
    %1774 = vmatpush1.msra.mxu0 0.0
    %1775 = vmatprep.subr.mxu0 0.0
    %1776 = vmatpush1.msra.mxu0 0.0
    %1777 = vmatprep.subr.mxu0 0.0
    %1778 = vmatpush1.msra.mxu0 0.0
    %1779 = vmatprep.subr.mxu0 0.0
    %1780 = vmatpush1.msra.mxu0 0.0
    %1781 = vmatprep.subr.mxu0 0.0
    %1782 = vmatpush1.msra.mxu0 0.0
    %1783 = vmatprep.subr.mxu0 0.0
    %1784 = vmatpush1.msra.mxu0 0.0
    %1785 = vmatprep.subr.mxu0 0.0
    %1786 = vmatpush1.msra.mxu0 0.0
    %1787 = vmatprep.subr.mxu0 0.0
    %1788 = vmatpush1.msra.mxu0 0.0
    %1789 = vmatprep.subr.mxu0 0.0
    %1790 = vmatpush1.msra.mxu0 0.0
    %1791 = vmatprep.subr.mxu0 0.0
    %1792 = vmatpush1.msra.mxu0 0.0
    %1793 = vmatprep.subr.mxu0 0.0
    %1794 = vmatpush1.msra.mxu0 0.0
    %1795 = vmatprep.subr.mxu0 0.0
    %1796 = vmatpush1.msra.mxu0 0.0
    %1797 = vmatprep.subr.mxu0 0.0
    %1798 = vmatpush1.msra.mxu0 0.0
    %1799 = vmatprep.subr.mxu0 0.0
    %1800 = vmatpush1.msra.mxu0 0.0
    %1801 = vmatprep.subr.mxu0 0.0
    %1802 = vmatpush1.msra.mxu0 0.0
    %1803 = vmatprep.subr.mxu0 0.0
    %1804 = vmatpush1.msra.mxu0 0.0
    %1805 = vmatprep.subr.mxu0 0.0
    %1806 = vmatpush1.msra.mxu0 0.0
    %1807 = vmatprep.subr.mxu0 0.0
    %1808 = vmatpush1.msra.mxu0 0.0
    %1809 = vmatprep.subr.mxu0 0.0
    %1810 = vmatpush1.msra.mxu0 0.0
    %1811 = vmatprep.subr.mxu0 0.0
    %1812 = vmatpush1.msra.mxu0 0.0
    %1813 = vmatprep.subr.mxu0 0.0
    %1814 = vmatpush1.msra.mxu0 0.0
    %1815 = vmatprep.subr.mxu0 0.0
    %1816 = vmatpush1.msra.mxu0 0.0
    %1817 = vmatprep.subr.mxu0 0.0
    %1818 = vmatpush1.msra.mxu0 0.0
    %1819 = vmatprep.subr.mxu0 0.0
    %1820 = vmatpush1.msra.mxu0 0.0
    %1821 = vmatprep.subr.mxu0 0.0
    %1822 = vmatpush1.msra.mxu0 0.0
    %1823 = vmatprep.subr.mxu0 0.0
    %1824 = vmatpush1.msra.mxu0 0.0
    %1825 = vmatprep.mubr.f32.mxu0 0.0
    %1826 = vmatmul.mubr.f32.gmra.mrb[0].mxu0 %v661
    %v1827 = vpop.f32.mrb[0].mxu0
    %v1828 = vadd.f32 1e-16, %v1827
    %v1829 = vpop.f32.mrb[0].mxu0
    %1830 = vmatprep.mubr.f32.mxu0 0.0
    %1831 = vmatmul.mubr.f32.gmra.mrb[0].mxu0 %v664
    %v1832 = vpop.f32.mrb[0].mxu0
    %v1833 = vadd.f32 1e-16, %v1832
    %v1834 = vpop.f32.mrb[0].mxu0
    %1835 = vdwg.mxu0
    %v1836 = vrcp.pop %v1828
    %v1837 = vrcp.pop %v1833
    %v1838 = vmul.f32 %v1688, %v1836
    %v1839 = vmul.f32 %v1690, %v1837
    %1841 = vset.pattern.permute.xlu0 0
    %1842 = vperm.xlu0 %1841, %v1838
    %v1843 = vpop.permute.xlu0 %1842
    %1846 = vset.pattern.permute.xlu0 0
    %1847 = vperm.xlu0 %1846, %v1839
    %v1848 = vpop.permute.xlu0 %1847
    %v1850 = vmul.f32 %v1843, %v1575
    %v1851 = vmul.f32 %v1848, %v1581
    %vm1852 = vcmp.gt.f32.partialorder %v1850, 0.0
    %vm1853 = vcmp.gt.f32.partialorder %v1851, 0.0
    %v1854 = vmin.f32 %v1850, 0.0
    %v1855 = vmin.f32 %v1851, 0.0
    %v1856 = vmul.f32 %v1854, 1.442695
    %v1857 = vpow.pop %v1856
    %v1858 = vmul.f32 %v1855, 1.442695
    %v1859 = vpow.pop %v1858
    %v1860 = vsub.f32 %v1857, 1.0
    %v1861 = vsub.f32 %v1859, 1.0
    %v1862 = vsel %vm1852, %v1850, %v1860
    %v1863 = vsel %vm1853, %v1851, %v1861
    %v1865 = vlaneseq
    %v1866 = vshrl.u32 %v1865, 7
    %v1867 = vsub.s32 0, %v1866
    %v1868 = vrot.slane %v1277, %v1867
    %v1871 = vsel %vm493, %v1862, 0
    %v1874 = vsel %vm493, %v1863, 0
    %1876 = vmatprep.subr.mxu0 0.0
    %1877 = vmatpush1.msra.mxu0 %v1272
    %1878 = vmatprep.subr.mxu0 0.0
    %1879 = vmatpush1.msra.mxu0 %v1273
    %1880 = vmatprep.subr.mxu0 0.0
    %1881 = vmatpush1.msra.mxu0 %v1274
    %1882 = vmatprep.subr.mxu0 0.0
    %1883 = vmatpush1.msra.mxu0 %v1275
    %1884 = vmatprep.subr.mxu0 0.0
    %1885 = vmatpush1.msra.mxu0 0.0
    %1886 = vmatprep.subr.mxu0 0.0
    %1887 = vmatpush1.msra.mxu0 0.0
    %1888 = vmatprep.subr.mxu0 0.0
    %1889 = vmatpush1.msra.mxu0 0.0
    %1890 = vmatprep.subr.mxu0 0.0
    %1891 = vmatpush1.msra.mxu0 0.0
    %1892 = vmatprep.subr.mxu0 0.0
    %1893 = vmatpush1.msra.mxu0 0.0
    %1894 = vmatprep.subr.mxu0 0.0
    %1895 = vmatpush1.msra.mxu0 0.0
    %1896 = vmatprep.subr.mxu0 0.0
    %1897 = vmatpush1.msra.mxu0 0.0
    %1898 = vmatprep.subr.mxu0 0.0
    %1899 = vmatpush1.msra.mxu0 0.0
    %1900 = vmatprep.subr.mxu0 0.0
    %1901 = vmatpush1.msra.mxu0 0.0
    %1902 = vmatprep.subr.mxu0 0.0
    %1903 = vmatpush1.msra.mxu0 0.0
    %1904 = vmatprep.subr.mxu0 0.0
    %1905 = vmatpush1.msra.mxu0 0.0
    %1906 = vmatprep.subr.mxu0 0.0
    %1907 = vmatpush1.msra.mxu0 0.0
    %1908 = vmatprep.subr.mxu0 0.0
    %1909 = vmatpush1.msra.mxu0 0.0
    %1910 = vmatprep.subr.mxu0 0.0
    %1911 = vmatpush1.msra.mxu0 0.0
    %1912 = vmatprep.subr.mxu0 0.0
    %1913 = vmatpush1.msra.mxu0 0.0
    %1914 = vmatprep.subr.mxu0 0.0
    %1915 = vmatpush1.msra.mxu0 0.0
    %1916 = vmatprep.subr.mxu0 0.0
    %1917 = vmatpush1.msra.mxu0 0.0
    %1918 = vmatprep.subr.mxu0 0.0
    %1919 = vmatpush1.msra.mxu0 0.0
    %1920 = vmatprep.subr.mxu0 0.0
    %1921 = vmatpush1.msra.mxu0 0.0
    %1922 = vmatprep.subr.mxu0 0.0
    %1923 = vmatpush1.msra.mxu0 0.0
    %1924 = vmatprep.subr.mxu0 0.0
    %1925 = vmatpush1.msra.mxu0 0.0
    %1926 = vmatprep.subr.mxu0 0.0
    %1927 = vmatpush1.msra.mxu0 0.0
    %1928 = vmatprep.subr.mxu0 0.0
    %1929 = vmatpush1.msra.mxu0 0.0
    %1930 = vmatprep.subr.mxu0 0.0
    %1931 = vmatpush1.msra.mxu0 0.0
    %1932 = vmatprep.subr.mxu0 0.0
    %1933 = vmatpush1.msra.mxu0 0.0
    %1934 = vmatprep.subr.mxu0 0.0
    %1935 = vmatpush1.msra.mxu0 0.0
    %1936 = vmatprep.subr.mxu0 0.0
    %1937 = vmatpush1.msra.mxu0 0.0
    %1938 = vmatprep.subr.mxu0 0.0
    %1939 = vmatpush1.msra.mxu0 0.0
    %1940 = vmatprep.mubr.f32.mxu0 0.0
    %1941 = vmatmul.mubr.f32.gmra.mrb[0].mxu0 %v1871
    %v1942 = vpop.f32.mrb[0].mxu0
    %v1943 = vadd.f32 %v1868, %v1942
    %v1944 = vpop.f32.mrb[0].mxu0
    %1945 = vmatprep.mubr.f32.mxu0 0.0
    %1946 = vmatmul.mubr.f32.gmra.mrb[0].mxu0 %v1874
    %v1947 = vpop.f32.mrb[0].mxu0
    %v1948 = vadd.f32 %v1868, %v1947
    %v1949 = vpop.f32.mrb[0].mxu0
    %1950 = vdwg.mxu0
    %1953 = vrot.lane.b32.xlu0 %v1575, 96
    %v1954 = vpop.permute.xlu0 %1953
    %1955 = vrot.lane.b32.xlu0 %v1581, 96
    %v1956 = vpop.permute.xlu0 %1955
    %v1959 = vadd.f32 %v1943, %v1954
    %v1960 = vadd.f32 %v1948, %v1956
    %v1961 = vmul.f32 %v1959, 0.5
    %v1962 = vmul.f32 %v1960, 0.5
    %v1963 = vtanh.pop %v1961
    %v1964 = vtanh.pop %v1962
    %v1965 = vadd.f32 %v1963, 1.0
    %v1966 = vadd.f32 %v1964, 1.0
    %v1967 = vmul.f32 %v1965, 0.5
    %v1968 = vmul.f32 %v1966, 0.5
    %1969 = vrot.lane.b32.xlu0 %v1575, 32
    %v1970 = vpop.permute.xlu0 %1969
    %1971 = vrot.lane.b32.xlu0 %v1581, 32
    %v1972 = vpop.permute.xlu0 %1971
    %v1975 = vmul.f32 %v1967, %v1970
    %v1976 = vmul.f32 %v1968, %v1972
    %1979 = vrot.lane.b32.xlu0 %v1975, 64
    %v1980 = vpop.permute.xlu0 %1979
    %1981 = vrot.lane.b32.xlu0 %v1976, 64
    %v1982 = vpop.permute.xlu0 %1981
    %v1985 = vadd.f32 %v1943, %v1980
    %v1986 = vadd.f32 %v1948, %v1982
    %v1987 = vtanh.pop %v1985
    %v1988 = vtanh.pop %v1986
    %v1989 = vsub.f32 1.0, %v1967
    %v1990 = vsub.f32 1.0, %v1968
    %1993 = vrot.lane.b32.xlu0 %v1987, 96
    %v1994 = vpop.permute.xlu0 %1993
    %1995 = vrot.lane.b32.xlu0 %v1988, 96
    %v1996 = vpop.permute.xlu0 %1995
    %v1999 = vmul.f32 %v1989, %v1994
    %v2000 = vmul.f32 %v1990, %v1996
    %2003 = vrot.lane.b32.xlu0 %v1652, 32
    %v2004 = vpop.permute.xlu0 %2003
    %2005 = vrot.lane.b32.xlu0 %v1657, 32
    %v2006 = vpop.permute.xlu0 %2005
    %v2009 = vmul.f32 %v1967, %v2004
    %v2010 = vmul.f32 %v1968, %v2006
    %v2011 = vadd.f32 %v1999, %v2009
    %v2012 = vadd.f32 %v2000, %v2010
    %2015 = vrot.lane.b32.xlu0 %v2011, 96
    %v2016 = vpop.permute.xlu0 %2015
    %2017 = vrot.lane.b32.xlu0 %v2012, 96
    %v2018 = vpop.permute.xlu0 %2017
    %2021 = vmatprep.subr.mxu0 0.0
    %2022 = vmatpush1.msra.mxu0 %v2016
    %2023 = vmatprep.subr.mxu0 0.0
    %2024 = vmatpush1.msra.mxu0 %v2018
    %2025 = vmatprep.subr.mxu0 0.0
    %2026 = vmatpush1.msra.mxu0 0.0
    %2027 = vmatprep.subr.mxu0 0.0
    %2028 = vmatpush1.msra.mxu0 0.0
    %2029 = vmatprep.subr.mxu0 0.0
    %2030 = vmatpush1.msra.mxu0 0.0
    %2031 = vmatprep.subr.mxu0 0.0
    %2032 = vmatpush1.msra.mxu0 0.0
    %2033 = vmatprep.subr.mxu0 0.0
    %2034 = vmatpush1.msra.mxu0 0.0
    %2035 = vmatprep.subr.mxu0 0.0
    %2036 = vmatpush1.msra.mxu0 0.0
    %2037 = vmatprep.subr.mxu0 0.0
    %2038 = vmatpush1.msra.mxu0 0.0
    %2039 = vmatprep.subr.mxu0 0.0
    %2040 = vmatpush1.msra.mxu0 0.0
    %2041 = vmatprep.subr.mxu0 0.0
    %2042 = vmatpush1.msra.mxu0 0.0
    %2043 = vmatprep.subr.mxu0 0.0
    %2044 = vmatpush1.msra.mxu0 0.0
    %2045 = vmatprep.subr.mxu0 0.0
    %2046 = vmatpush1.msra.mxu0 0.0
    %2047 = vmatprep.subr.mxu0 0.0
    %2048 = vmatpush1.msra.mxu0 0.0
    %2049 = vmatprep.subr.mxu0 0.0
    %2050 = vmatpush1.msra.mxu0 0.0
    %2051 = vmatprep.subr.mxu0 0.0
    %2052 = vmatpush1.msra.mxu0 0.0
    %2053 = vmatprep.subr.mxu0 0.0
    %2054 = vmatpush1.msra.mxu0 0.0
    %2055 = vmatprep.subr.mxu0 0.0
    %2056 = vmatpush1.msra.mxu0 0.0
    %2057 = vmatprep.subr.mxu0 0.0
    %2058 = vmatpush1.msra.mxu0 0.0
    %2059 = vmatprep.subr.mxu0 0.0
    %2060 = vmatpush1.msra.mxu0 0.0
    %2061 = vmatprep.subr.mxu0 0.0
    %2062 = vmatpush1.msra.mxu0 0.0
    %2063 = vmatprep.subr.mxu0 0.0
    %2064 = vmatpush1.msra.mxu0 0.0
    %2065 = vmatprep.subr.mxu0 0.0
    %2066 = vmatpush1.msra.mxu0 0.0
    %2067 = vmatprep.subr.mxu0 0.0
    %2068 = vmatpush1.msra.mxu0 0.0
    %2069 = vmatprep.subr.mxu0 0.0
    %2070 = vmatpush1.msra.mxu0 0.0
    %2071 = vmatprep.subr.mxu0 0.0
    %2072 = vmatpush1.msra.mxu0 0.0
    %2073 = vmatprep.subr.mxu0 0.0
    %2074 = vmatpush1.msra.mxu0 0.0
    %2075 = vmatprep.subr.mxu0 0.0
    %2076 = vmatpush1.msra.mxu0 0.0
    %2077 = vmatprep.subr.mxu0 0.0
    %2078 = vmatpush1.msra.mxu0 0.0
    %2079 = vmatprep.subr.mxu0 0.0
    %2080 = vmatpush1.msra.mxu0 0.0
    %2081 = vmatprep.subr.mxu0 0.0
    %2082 = vmatpush1.msra.mxu0 0.0
    %2083 = vmatprep.subr.mxu0 0.0
    %2084 = vmatpush1.msra.mxu0 0.0
    %2085 = vmatprep.mubr.f32.mxu0 0.0
    %2086 = vmatmul.mubr.f32.gmra.mrb[0].mxu0 %v851
    %v2087 = vpop.f32.mrb[0].mxu0
    %v2088 = vadd.f32 0.0, %v2087
    %v2089 = vpop.f32.mrb[0].mxu0
    %2090 = vdwg.mxu0
    %2091 = vst.msk [vmem:[#allocation13] sm:$0xff] %vm493, %v2088
    // Predicated region
    $region90: #{tpu_custom_call.1} parent=1 // pred_check
      _
    $region91: #{tpu_custom_call.1} parent=1 // pred_check_branch
      %2093 = sbr.rel (0) target = $region93
    $region92: #{tpu_custom_call.1} parent=1 // pred_region
      %s2095 = ssub.s32 128, 128
      %2096 = vsyncadd [#allocation4], %s2095
      %s2098 = sshll.u32 [#allocation13], 4
      %s2099 = int_to_ptr.vmem [resolvable:$true] %s2098
      %2101 = dma.vmem_to_hbm [thread:$0]  %s2099, 128, %s16, [#allocation4]
    $region93: #{tpu_custom_call.1} parent=1 // pred_fallthru
      _
    // Predicated region
    $region94: #{tpu_custom_call.1} parent=1 // pred_check
      _
    $region95: #{tpu_custom_call.1} parent=1 // pred_check_branch
      %2103 = sbr.rel (0) target = $region97
    $region96: #{tpu_custom_call.1} parent=1 // pred_region
      %2104 = dma.done [#allocation4], 128
    $region97: #{tpu_custom_call.1} parent=1 // pred_fallthru
      _
    %2105 = vsyncpa [#allocation3], 1
    %2106 = vsyncpa [#allocation6], 1
    %2107 = vsyncpa [#allocation9], 1
    %2108 = vsyncpa [#allocation12], 1
    %2109 = vsyncpa [#allocation4], 1

</llo_original>
